<compile_context>
chip_gen: v6e
topology: v6e:2x2x1
jax: 0.10.0
libtpu: 0.0.40
codegen_flags: <defaults>
</compile_context>

<pallas_src>
import functools
import math

import jax
import jax.numpy as jnp
from jax import lax
from jax.experimental import pallas as pl
from jax.experimental.pallas import tpu as pltpu


_NEG_INF = -1e30  # large finite negative: avoids NaN from (-inf) - (-inf)


def _mha_kernel(xq_ref, xk_ref, xv_ref, m_ref,
                wq_ref, bq_ref, wk_ref, bk_ref, wv_ref, bv_ref,
                wo_ref, bo_ref, o_ref, k_sc, v_sc, ctx_sc, *,
                num_heads, scale):
    """One (batch, query-tile) step of fused multi-head attention."""
    qi = pl.program_id(1)

    # Project K and V for this batch once (full-width, lane-dense matmuls);
    # reused by every query tile of the same batch via persistent scratch.
    @pl.when(qi == 0)
    def _():
        k_sc[...] = (jnp.dot(xk_ref[0], wk_ref[...],
                             preferred_element_type=jnp.float32) + bk_ref[...])
        v_sc[...] = (jnp.dot(xv_ref[0], wv_ref[...],
                             preferred_element_type=jnp.float32) + bv_ref[...])

    # Project this query tile; fold 1/sqrt(d_k) into q (cheaper than scaling
    # every (TQ, S) score tile).
    q = (jnp.dot(xq_ref[0], wq_ref[...],
                 preferred_element_type=jnp.float32) + bq_ref[...]) * scale

    k_all = k_sc[...]
    v_all = v_sc[...]
    key_valid = m_ref[0] != 0                      # (1, S) int mask -> bool

    d_k = q.shape[1] // num_heads

    # In-kernel head loop over resident q/k/v (static slices, unrolled at
    # trace time).  Per-head contexts land in ctx_sc so the output projection
    # below is one full-contraction matmul.
    for h in range(num_heads):
        sl = slice(h * d_k, (h + 1) * d_k)
        qh, kh, vh = q[:, sl], k_all[:, sl], v_all[:, sl]
        scores = lax.dot_general(qh, kh, (((1,), (1,)), ((), ())),
                                 preferred_element_type=jnp.float32)  # (TQ,S)
        scores = jnp.where(key_valid, scores, _NEG_INF)
        s_max = jnp.max(scores, axis=-1, keepdims=True)
        e = jnp.exp(scores - s_max)
        denom = jnp.sum(e, axis=-1, keepdims=True)
        p = e * pl.reciprocal(denom, approx=True)  # EUP divide (nearly free)
        # TODO(synk): dropout(p) skipped (eval-mode semantics).
        ctx_sc[:, sl] = jnp.dot(p, vh, preferred_element_type=jnp.float32)

    out = jnp.dot(ctx_sc[...], wo_ref[...],
                  preferred_element_type=jnp.float32) + bo_ref[...]
    o_ref[0] = out.astype(o_ref.dtype)


def _pick_q_tile(seq_len):
    for t in (512, 256, 128):
        if seq_len % t == 0:
            return t
    return seq_len


@functools.partial(jax.jit, static_argnames=("num_heads",))
def mha_forward(query, key, value, mask, params, num_heads):
    """Mirrors MultiHeadedAttention.forward(query, key, value, mask)."""
    B, S, D = query.shape
    H = num_heads
    d_k = D // H
    scale = 1.0 / math.sqrt(d_k)
    TQ = _pick_q_tile(S)
    QT = S // TQ

    # Key-padding mask as a small int array (no (B,S,S) f32 materialization).
    if mask is None:
        mask_i = jnp.ones((B, 1, S), jnp.int32)
    else:
        mask_i = (jnp.broadcast_to(mask, (B, 1, S)) != 0).astype(jnp.int32)

    # Weights stored transposed so the kernel computes x @ W^T directly; they
    # stay VMEM-resident via constant index maps.
    wq_t = params["wq"].T
    wk_t = params["wk"].T
    wv_t = params["wv"].T
    wo_t = params["wo"].T
    bq2 = params["bq"].reshape(1, D)
    bk2 = params["bk"].reshape(1, D)
    bv2 = params["bv"].reshape(1, D)
    bo2 = params["bo"].reshape(1, D)

    kernel = functools.partial(_mha_kernel, num_heads=H, scale=scale)

    batch_only = lambda b, qi: (b, 0, 0)
    q_tile = lambda b, qi: (b, qi, 0)
    const2 = lambda b, qi: (0, 0)

    itemsize = query.dtype.itemsize
    cost = pl.CostEstimate(
        flops=8 * B * S * D * D + 4 * B * S * S * D,
        transcendentals=B * H * S * S + B * H * S,
        bytes_accessed=(4 * B * S * D * itemsize          # q, k, v, out
                        + B * S * 4                       # mask
                        + 4 * D * D * itemsize            # weights
                        + 4 * D * itemsize),              # biases
    )

    out = pl.pallas_call(
        kernel,
        out_shape=jax.ShapeDtypeStruct((B, S, D), query.dtype),
        grid_spec=pltpu.PrefetchScalarGridSpec(
            num_scalar_prefetch=0,
            grid=(B, QT),
            in_specs=[
                pl.BlockSpec((1, TQ, D), q_tile),      # query tile
                pl.BlockSpec((1, S, D), batch_only),   # key   (full seq)
                pl.BlockSpec((1, S, D), batch_only),   # value (full seq)
                pl.BlockSpec((1, 1, S), batch_only),   # key-padding mask
                pl.BlockSpec((D, D), const2),          # Wq^T (resident)
                pl.BlockSpec((1, D), const2),          # bq
                pl.BlockSpec((D, D), const2),          # Wk^T
                pl.BlockSpec((1, D), const2),          # bk
                pl.BlockSpec((D, D), const2),          # Wv^T
                pl.BlockSpec((1, D), const2),          # bv
                pl.BlockSpec((D, D), const2),          # Wo^T
                pl.BlockSpec((1, D), const2),          # bo
            ],
            out_specs=pl.BlockSpec((1, TQ, D), q_tile),
            scratch_shapes=[
                pltpu.VMEM((S, D), jnp.float32),       # projected K (per batch)
                pltpu.VMEM((S, D), jnp.float32),       # projected V (per batch)
                pltpu.VMEM((TQ, D), jnp.float32),      # per-tile context
            ],
        ),
        compiler_params=pltpu.CompilerParams(
            dimension_semantics=("parallel", "arbitrary"),
            vmem_limit_bytes=64 * 1024 * 1024,
        ),
        cost_estimate=cost,
    )(query, key, value, mask_i,
      wq_t, bq2, wk_t, bk2, wv_t, bv2, wo_t, bo2)
    return out


def _reference_mha(q_in, k_in, v_in, mask, p, num_heads):
    """Plain-JAX reference mirroring the PyTorch module (eval mode)."""
    B, S, D = q_in.shape
    H = num_heads
    d_k = D // H

    def lin(x, w, b):
        return x @ w.T + b

    q = lin(q_in, p["wq"], p["bq"]).reshape(B, S, H, d_k).transpose(0, 2, 1, 3)
    k = lin(k_in, p["wk"], p["bk"]).reshape(B, S, H, d_k).transpose(0, 2, 1, 3)
    v = lin(v_in, p["wv"], p["bv"]).reshape(B, S, H, d_k).transpose(0, 2, 1, 3)

    scores = jnp.einsum("bhqd,bhkd->bhqk", q, k) / math.sqrt(d_k)
    m = jnp.broadcast_to(mask, (B, 1, S))[:, None, :, :]
    scores = jnp.where(m == 0, -jnp.inf, scores)
    attn = jax.nn.softmax(scores, axis=-1)
    ctx = jnp.einsum("bhqk,bhkd->bhqd", attn, v)
    ctx = ctx.transpose(0, 2, 1, 3).reshape(B, S, D)
    return ctx @ p["wo"].T + p["bo"]


def init_params(rng, d_model):
    ks = jax.random.split(rng, 8)
    s = 1.0 / math.sqrt(d_model)
    mk = lambda k, shape: jax.random.uniform(k, shape, jnp.float32, -s, s)
    return {
        "wq": mk(ks[0], (d_model, d_model)), "bq": mk(ks[1], (d_model,)),
        "wk": mk(ks[2], (d_model, d_model)), "bk": mk(ks[3], (d_model,)),
        "wv": mk(ks[4], (d_model, d_model)), "bv": mk(ks[5], (d_model,)),
        "wo": mk(ks[6], (d_model, d_model)), "bo": mk(ks[7], (d_model,)),
    }


if __name__ == "__main__":
    rng = jax.random.PRNGKey(0)
    k_p, k_q, k_k, k_v = jax.random.split(rng, 4)

    B, S, H, D = 2, 8, 4, 32          # batch, seq, heads, d_model (d_k = 8)
    params = init_params(k_p, D)

    query = jax.random.normal(k_q, (B, S, D), jnp.float32)
    key_in = jax.random.normal(k_k, (B, S, D), jnp.float32)
    value = jax.random.normal(k_v, (B, S, D), jnp.float32)

    # Padding-style mask (B, 1, S): batch 0 sees all keys, batch 1 sees S-3.
    lengths = jnp.array([S, S - 3])
    mask = (jnp.arange(S)[None, :] < lengths[:, None]).astype(jnp.float32)
    mask = mask[:, None, :]

    out = mha_forward(query, key_in, value, mask, params, num_heads=H)
    out = jax.block_until_ready(out)

    ref = _reference_mha(query, key_in, value, mask, params, H)

    assert out.shape == (B, S, D)
    assert bool(jnp.all(jnp.isfinite(out)))
    # Slightly relaxed tolerance: softmax denominator uses the EUP approximate
    # reciprocal (~2^-12 relative error).
    assert jnp.allclose(out, ref, atol=2e-3, rtol=2e-3)

    print("KERNEL_OK")
</pallas_src>

<mosaic_0001>
module attributes {stable_mosaic.version = 11 : i64} {
  func.func @_mha_kernel(%arg0: i32, %arg1: i32, %arg2: memref<1x8x32xf32, #tpu.memory_space<vmem>>, %arg3: memref<1x8x32xf32, #tpu.memory_space<vmem>>, %arg4: memref<1x8x32xf32, #tpu.memory_space<vmem>>, %arg5: memref<1x1x8xi32, #tpu.memory_space<vmem>>, %arg6: memref<32x32xf32, #tpu.memory_space<vmem>>, %arg7: memref<1x32xf32, #tpu.memory_space<vmem>>, %arg8: memref<32x32xf32, #tpu.memory_space<vmem>>, %arg9: memref<1x32xf32, #tpu.memory_space<vmem>>, %arg10: memref<32x32xf32, #tpu.memory_space<vmem>>, %arg11: memref<1x32xf32, #tpu.memory_space<vmem>>, %arg12: memref<32x32xf32, #tpu.memory_space<vmem>>, %arg13: memref<1x32xf32, #tpu.memory_space<vmem>>, %arg14: memref<1x8x32xf32, #tpu.memory_space<vmem>>, %arg15: memref<8x32xf32, #tpu.memory_space<vmem>>, %arg16: memref<8x32xf32, #tpu.memory_space<vmem>>, %arg17: memref<8x32xf32, #tpu.memory_space<vmem>>) attributes {dimension_semantics = [#tpu.dimension_semantics<parallel>, #tpu.dimension_semantics<arbitrary>], iteration_bounds = array<i64: 2, 1>, scalar_prefetch = 0 : i64, scratch_operands = 3 : i64, tpu.core_type = #tpu.core_type<tc>, window_params = [{transform_indices = @transform_0, window_bounds = array<i64: 1, 8, 32>}, {transform_indices = @transform_1, window_bounds = array<i64: 1, 8, 32>}, {transform_indices = @transform_2, window_bounds = array<i64: 1, 8, 32>}, {transform_indices = @transform_3, window_bounds = array<i64: 1, 1, 8>}, {pipeline_mode = #tpu.pipeline_mode<synchronous>, transform_indices = @transform_4, window_bounds = array<i64: 32, 32>}, {pipeline_mode = #tpu.pipeline_mode<synchronous>, transform_indices = @transform_5, window_bounds = array<i64: 1, 32>}, {pipeline_mode = #tpu.pipeline_mode<synchronous>, transform_indices = @transform_6, window_bounds = array<i64: 32, 32>}, {pipeline_mode = #tpu.pipeline_mode<synchronous>, transform_indices = @transform_7, window_bounds = array<i64: 1, 32>}, {pipeline_mode = #tpu.pipeline_mode<synchronous>, transform_indices = @transform_8, window_bounds = array<i64: 32, 32>}, {pipeline_mode = #tpu.pipeline_mode<synchronous>, transform_indices = @transform_9, window_bounds = array<i64: 1, 32>}, {pipeline_mode = #tpu.pipeline_mode<synchronous>, transform_indices = @transform_10, window_bounds = array<i64: 32, 32>}, {pipeline_mode = #tpu.pipeline_mode<synchronous>, transform_indices = @transform_11, window_bounds = array<i64: 1, 32>}, {transform_indices = @transform_12, window_bounds = array<i64: 1, 8, 32>}]} {
    %c0_i32 = arith.constant 0 : i32
    %0 = arith.cmpi eq, %arg1, %c0_i32 : i32
    %1 = arith.extui %0 : i1 to i32
    %c0_i32_0 = arith.constant 0 : i32
    %2 = arith.cmpi ne, %1, %c0_i32_0 : i32
    scf.if %2 {
      %c0_51 = arith.constant 0 : index
      %c0_52 = arith.constant 0 : index
      %c0_53 = arith.constant 0 : index
      %107 = vector.load %arg3[%c0_51, %c0_52, %c0_53] : memref<1x8x32xf32, #tpu.memory_space<vmem>>, vector<1x8x32xf32>
      %108 = vector.shape_cast %107 : vector<1x8x32xf32> to vector<8x32xf32>
      %c0_54 = arith.constant 0 : index
      %c0_55 = arith.constant 0 : index
      %109 = vector.load %arg8[%c0_54, %c0_55] : memref<32x32xf32, #tpu.memory_space<vmem>>, vector<32x32xf32>
      %cst_56 = arith.constant dense<0.000000e+00> : vector<8x32xf32>
      %110 = tpu.matmul %108, %109, %cst_56 {dimension_numbers = #tpu.dot_dimension_numbers<[1], [0], [0], [1], [0, 0, 1, 1], [], []>} : vector<8x32xf32>, vector<32x32xf32>, vector<8x32xf32> -> vector<8x32xf32>
      %c0_57 = arith.constant 0 : index
      %c0_58 = arith.constant 0 : index
      %111 = vector.load %arg9[%c0_57, %c0_58] : memref<1x32xf32, #tpu.memory_space<vmem>>, vector<1x32xf32>
      %112 = vector.broadcast %111 : vector<1x32xf32> to vector<8x32xf32>
      %113 = arith.addf %110, %112 : vector<8x32xf32>
      %c0_59 = arith.constant 0 : index
      %c0_60 = arith.constant 0 : index
      %114 = vector.load %arg15[%c0_59, %c0_60] : memref<8x32xf32, #tpu.memory_space<vmem>>, vector<8x32xf32>
      tpu.vector_store %arg15[%c0_59, %c0_60], %113 {strides = array<i32>} : memref<8x32xf32, #tpu.memory_space<vmem>>, vector<8x32xf32>,
      %c0_61 = arith.constant 0 : index
      %c0_62 = arith.constant 0 : index
      %c0_63 = arith.constant 0 : index
      %115 = vector.load %arg4[%c0_61, %c0_62, %c0_63] : memref<1x8x32xf32, #tpu.memory_space<vmem>>, vector<1x8x32xf32>
      %116 = vector.shape_cast %115 : vector<1x8x32xf32> to vector<8x32xf32>
      %c0_64 = arith.constant 0 : index
      %c0_65 = arith.constant 0 : index
      %117 = vector.load %arg10[%c0_64, %c0_65] : memref<32x32xf32, #tpu.memory_space<vmem>>, vector<32x32xf32>
      %cst_66 = arith.constant dense<0.000000e+00> : vector<8x32xf32>
      %118 = tpu.matmul %116, %117, %cst_66 {dimension_numbers = #tpu.dot_dimension_numbers<[1], [0], [0], [1], [0, 0, 1, 1], [], []>} : vector<8x32xf32>, vector<32x32xf32>, vector<8x32xf32> -> vector<8x32xf32>
      %c0_67 = arith.constant 0 : index
      %c0_68 = arith.constant 0 : index
      %119 = vector.load %arg11[%c0_67, %c0_68] : memref<1x32xf32, #tpu.memory_space<vmem>>, vector<1x32xf32>
      %120 = vector.broadcast %119 : vector<1x32xf32> to vector<8x32xf32>
      %121 = arith.addf %118, %120 : vector<8x32xf32>
      %c0_69 = arith.constant 0 : index
      %c0_70 = arith.constant 0 : index
      %122 = vector.load %arg16[%c0_69, %c0_70] : memref<8x32xf32, #tpu.memory_space<vmem>>, vector<8x32xf32>
      tpu.vector_store %arg16[%c0_69, %c0_70], %121 {strides = array<i32>} : memref<8x32xf32, #tpu.memory_space<vmem>>, vector<8x32xf32>,
    } else {
    }
    %c0 = arith.constant 0 : index
    %c0_1 = arith.constant 0 : index
    %c0_2 = arith.constant 0 : index
    %3 = vector.load %arg2[%c0, %c0_1, %c0_2] : memref<1x8x32xf32, #tpu.memory_space<vmem>>, vector<1x8x32xf32>
    %4 = vector.shape_cast %3 : vector<1x8x32xf32> to vector<8x32xf32>
    %c0_3 = arith.constant 0 : index
    %c0_4 = arith.constant 0 : index
    %5 = vector.load %arg6[%c0_3, %c0_4] : memref<32x32xf32, #tpu.memory_space<vmem>>, vector<32x32xf32>
    %cst = arith.constant dense<0.000000e+00> : vector<8x32xf32>
    %6 = tpu.matmul %4, %5, %cst {dimension_numbers = #tpu.dot_dimension_numbers<[1], [0], [0], [1], [0, 0, 1, 1], [], []>} : vector<8x32xf32>, vector<32x32xf32>, vector<8x32xf32> -> vector<8x32xf32>
    %c0_5 = arith.constant 0 : index
    %c0_6 = arith.constant 0 : index
    %7 = vector.load %arg7[%c0_5, %c0_6] : memref<1x32xf32, #tpu.memory_space<vmem>>, vector<1x32xf32>
    %8 = vector.broadcast %7 : vector<1x32xf32> to vector<8x32xf32>
    %9 = arith.addf %6, %8 : vector<8x32xf32>
    %cst_7 = arith.constant 0.353553385 : f32
    %10 = vector.broadcast %cst_7 : f32 to vector<8x32xf32>
    %11 = arith.mulf %9, %10 : vector<8x32xf32>
    %c0_8 = arith.constant 0 : index
    %c0_9 = arith.constant 0 : index
    %12 = vector.load %arg15[%c0_8, %c0_9] : memref<8x32xf32, #tpu.memory_space<vmem>>, vector<8x32xf32>
    %c0_10 = arith.constant 0 : index
    %c0_11 = arith.constant 0 : index
    %13 = vector.load %arg16[%c0_10, %c0_11] : memref<8x32xf32, #tpu.memory_space<vmem>>, vector<8x32xf32>
    %c0_12 = arith.constant 0 : index
    %c0_13 = arith.constant 0 : index
    %c0_14 = arith.constant 0 : index
    %14 = vector.load %arg5[%c0_12, %c0_13, %c0_14] : memref<1x1x8xi32, #tpu.memory_space<vmem>>, vector<1x1x8xi32>
    %15 = vector.shape_cast %14 : vector<1x1x8xi32> to vector<1x8xi32>
    %c0_i32_15 = arith.constant 0 : i32
    %16 = vector.broadcast %c0_i32_15 : i32 to vector<1x8xi32>
    %17 = arith.cmpi ne, %15, %16 : vector<1x8xi32>
    %18 = vector.extract_strided_slice %11 {offsets = [0, 0], sizes = [8, 8], strides = [1, 1]} : vector<8x32xf32> to vector<8x8xf32>
    %19 = vector.extract_strided_slice %12 {offsets = [0, 0], sizes = [8, 8], strides = [1, 1]} : vector<8x32xf32> to vector<8x8xf32>
    %20 = vector.extract_strided_slice %13 {offsets = [0, 0], sizes = [8, 8], strides = [1, 1]} : vector<8x32xf32> to vector<8x8xf32>
    %cst_16 = arith.constant dense<0.000000e+00> : vector<8x8xf32>
    %21 = tpu.matmul %18, %19, %cst_16 {dimension_numbers = #tpu.dot_dimension_numbers<[1], [1], [0], [0], [0, 0, 1, 0], [], []>} : vector<8x8xf32>, vector<8x8xf32>, vector<8x8xf32> -> vector<8x8xf32>
    %cst_17 = arith.constant -1.000000e+30 : f32
    %22 = vector.shape_cast %17 : vector<1x8xi1> to vector<1x8xi1>
    %23 = vector.broadcast %22 : vector<1x8xi1> to vector<8x8xi1>
    %24 = vector.broadcast %cst_17 : f32 to vector<8x8xf32>
    %25 = arith.select %23, %21, %24 : vector<8x8xi1>, vector<8x8xf32>
    %cst_18 = arith.constant dense<0xFF800000> : vector<8xf32>
    %26 = vector.multi_reduction <maximumf>, %25, %cst_18 [1] : vector<8x8xf32> to vector<8xf32>
    %27 = vector.shape_cast %26 : vector<8xf32> to vector<8x1xf32>
    %28 = vector.broadcast %27 : vector<8x1xf32> to vector<8x8xf32>
    %29 = arith.subf %25, %28 : vector<8x8xf32>
    %30 = math.exp %29 : vector<8x8xf32>
    %cst_19 = arith.constant dense<0.000000e+00> : vector<8xf32>
    %31 = vector.multi_reduction <add>, %30, %cst_19 [1] : vector<8x8xf32> to vector<8xf32>
    %32 = vector.shape_cast %31 : vector<8xf32> to vector<8x1xf32>
    %33 = tpu.reciprocal %32 {approx = true} : vector<8x1xf32> -> vector<8x1xf32>
    %34 = vector.broadcast %33 : vector<8x1xf32> to vector<8x8xf32>
    %35 = arith.mulf %30, %34 : vector<8x8xf32>
    %cst_20 = arith.constant dense<0.000000e+00> : vector<8x8xf32>
    %36 = tpu.matmul %35, %20, %cst_20 {dimension_numbers = #tpu.dot_dimension_numbers<[1], [0], [0], [1], [0, 0, 1, 1], [], []>} : vector<8x8xf32>, vector<8x8xf32>, vector<8x8xf32> -> vector<8x8xf32>
    %c0_21 = arith.constant 0 : index
    %c0_22 = arith.constant 0 : index
    %37 = vector.load %arg17[%c0_21, %c0_22] : memref<8x32xf32, #tpu.memory_space<vmem>>, vector<8x8xf32>
    tpu.vector_store %arg17[%c0_21, %c0_22], %36 {strides = array<i32>} : memref<8x32xf32, #tpu.memory_space<vmem>>, vector<8x8xf32>,
    %38 = vector.extract_strided_slice %11 {offsets = [0, 8], sizes = [8, 8], strides = [1, 1]} : vector<8x32xf32> to vector<8x8xf32>
    %39 = vector.extract_strided_slice %12 {offsets = [0, 8], sizes = [8, 8], strides = [1, 1]} : vector<8x32xf32> to vector<8x8xf32>
    %40 = vector.extract_strided_slice %13 {offsets = [0, 8], sizes = [8, 8], strides = [1, 1]} : vector<8x32xf32> to vector<8x8xf32>
    %cst_23 = arith.constant dense<0.000000e+00> : vector<8x8xf32>
    %41 = tpu.matmul %38, %39, %cst_23 {dimension_numbers = #tpu.dot_dimension_numbers<[1], [1], [0], [0], [0, 0, 1, 0], [], []>} : vector<8x8xf32>, vector<8x8xf32>, vector<8x8xf32> -> vector<8x8xf32>
    %cst_24 = arith.constant -1.000000e+30 : f32
    %42 = vector.shape_cast %17 : vector<1x8xi1> to vector<1x8xi1>
    %43 = vector.broadcast %42 : vector<1x8xi1> to vector<8x8xi1>
    %44 = vector.broadcast %cst_24 : f32 to vector<8x8xf32>
    %45 = arith.select %43, %41, %44 : vector<8x8xi1>, vector<8x8xf32>
    %cst_25 = arith.constant dense<0xFF800000> : vector<8xf32>
    %46 = vector.multi_reduction <maximumf>, %45, %cst_25 [1] : vector<8x8xf32> to vector<8xf32>
    %47 = vector.shape_cast %46 : vector<8xf32> to vector<8x1xf32>
    %48 = vector.broadcast %47 : vector<8x1xf32> to vector<8x8xf32>
    %49 = arith.subf %45, %48 : vector<8x8xf32>
    %50 = math.exp %49 : vector<8x8xf32>
    %cst_26 = arith.constant dense<0.000000e+00> : vector<8xf32>
    %51 = vector.multi_reduction <add>, %50, %cst_26 [1] : vector<8x8xf32> to vector<8xf32>
    %52 = vector.shape_cast %51 : vector<8xf32> to vector<8x1xf32>
    %53 = tpu.reciprocal %52 {approx = true} : vector<8x1xf32> -> vector<8x1xf32>
    %54 = vector.broadcast %53 : vector<8x1xf32> to vector<8x8xf32>
    %55 = arith.mulf %50, %54 : vector<8x8xf32>
    %cst_27 = arith.constant dense<0.000000e+00> : vector<8x8xf32>
    %56 = tpu.matmul %55, %40, %cst_27 {dimension_numbers = #tpu.dot_dimension_numbers<[1], [0], [0], [1], [0, 0, 1, 1], [], []>} : vector<8x8xf32>, vector<8x8xf32>, vector<8x8xf32> -> vector<8x8xf32>
    %c0_28 = arith.constant 0 : index
    %c8 = arith.constant 8 : index
    %57 = vector.load %arg17[%c0_28, %c8] : memref<8x32xf32, #tpu.memory_space<vmem>>, vector<8x8xf32>
    tpu.vector_store %arg17[%c0_28, %c8], %56 {strides = array<i32>} : memref<8x32xf32, #tpu.memory_space<vmem>>, vector<8x8xf32>,
    %58 = vector.extract_strided_slice %11 {offsets = [0, 16], sizes = [8, 8], strides = [1, 1]} : vector<8x32xf32> to vector<8x8xf32>
    %59 = vector.extract_strided_slice %12 {offsets = [0, 16], sizes = [8, 8], strides = [1, 1]} : vector<8x32xf32> to vector<8x8xf32>
    %60 = vector.extract_strided_slice %13 {offsets = [0, 16], sizes = [8, 8], strides = [1, 1]} : vector<8x32xf32> to vector<8x8xf32>
    %cst_29 = arith.constant dense<0.000000e+00> : vector<8x8xf32>
    %61 = tpu.matmul %58, %59, %cst_29 {dimension_numbers = #tpu.dot_dimension_numbers<[1], [1], [0], [0], [0, 0, 1, 0], [], []>} : vector<8x8xf32>, vector<8x8xf32>, vector<8x8xf32> -> vector<8x8xf32>
    %cst_30 = arith.constant -1.000000e+30 : f32
    %62 = vector.shape_cast %17 : vector<1x8xi1> to vector<1x8xi1>
    %63 = vector.broadcast %62 : vector<1x8xi1> to vector<8x8xi1>
    %64 = vector.broadcast %cst_30 : f32 to vector<8x8xf32>
    %65 = arith.select %63, %61, %64 : vector<8x8xi1>, vector<8x8xf32>
    %cst_31 = arith.constant dense<0xFF800000> : vector<8xf32>
    %66 = vector.multi_reduction <maximumf>, %65, %cst_31 [1] : vector<8x8xf32> to vector<8xf32>
    %67 = vector.shape_cast %66 : vector<8xf32> to vector<8x1xf32>
    %68 = vector.broadcast %67 : vector<8x1xf32> to vector<8x8xf32>
    %69 = arith.subf %65, %68 : vector<8x8xf32>
    %70 = math.exp %69 : vector<8x8xf32>
    %cst_32 = arith.constant dense<0.000000e+00> : vector<8xf32>
    %71 = vector.multi_reduction <add>, %70, %cst_32 [1] : vector<8x8xf32> to vector<8xf32>
    %72 = vector.shape_cast %71 : vector<8xf32> to vector<8x1xf32>
    %73 = tpu.reciprocal %72 {approx = true} : vector<8x1xf32> -> vector<8x1xf32>
    %74 = vector.broadcast %73 : vector<8x1xf32> to vector<8x8xf32>
    %75 = arith.mulf %70, %74 : vector<8x8xf32>
    %cst_33 = arith.constant dense<0.000000e+00> : vector<8x8xf32>
    %76 = tpu.matmul %75, %60, %cst_33 {dimension_numbers = #tpu.dot_dimension_numbers<[1], [0], [0], [1], [0, 0, 1, 1], [], []>} : vector<8x8xf32>, vector<8x8xf32>, vector<8x8xf32> -> vector<8x8xf32>
    %c0_34 = arith.constant 0 : index
    %c16 = arith.constant 16 : index
    %77 = vector.load %arg17[%c0_34, %c16] : memref<8x32xf32, #tpu.memory_space<vmem>>, vector<8x8xf32>
    tpu.vector_store %arg17[%c0_34, %c16], %76 {strides = array<i32>} : memref<8x32xf32, #tpu.memory_space<vmem>>, vector<8x8xf32>,
    %78 = vector.extract_strided_slice %11 {offsets = [0, 24], sizes = [8, 8], strides = [1, 1]} : vector<8x32xf32> to vector<8x8xf32>
    %79 = vector.extract_strided_slice %12 {offsets = [0, 24], sizes = [8, 8], strides = [1, 1]} : vector<8x32xf32> to vector<8x8xf32>
    %80 = vector.extract_strided_slice %13 {offsets = [0, 24], sizes = [8, 8], strides = [1, 1]} : vector<8x32xf32> to vector<8x8xf32>
    %cst_35 = arith.constant dense<0.000000e+00> : vector<8x8xf32>
    %81 = tpu.matmul %78, %79, %cst_35 {dimension_numbers = #tpu.dot_dimension_numbers<[1], [1], [0], [0], [0, 0, 1, 0], [], []>} : vector<8x8xf32>, vector<8x8xf32>, vector<8x8xf32> -> vector<8x8xf32>
    %cst_36 = arith.constant -1.000000e+30 : f32
    %82 = vector.shape_cast %17 : vector<1x8xi1> to vector<1x8xi1>
    %83 = vector.broadcast %82 : vector<1x8xi1> to vector<8x8xi1>
    %84 = vector.broadcast %cst_36 : f32 to vector<8x8xf32>
    %85 = arith.select %83, %81, %84 : vector<8x8xi1>, vector<8x8xf32>
    %cst_37 = arith.constant dense<0xFF800000> : vector<8xf32>
    %86 = vector.multi_reduction <maximumf>, %85, %cst_37 [1] : vector<8x8xf32> to vector<8xf32>
    %87 = vector.shape_cast %86 : vector<8xf32> to vector<8x1xf32>
    %88 = vector.broadcast %87 : vector<8x1xf32> to vector<8x8xf32>
    %89 = arith.subf %85, %88 : vector<8x8xf32>
    %90 = math.exp %89 : vector<8x8xf32>
    %cst_38 = arith.constant dense<0.000000e+00> : vector<8xf32>
    %91 = vector.multi_reduction <add>, %90, %cst_38 [1] : vector<8x8xf32> to vector<8xf32>
    %92 = vector.shape_cast %91 : vector<8xf32> to vector<8x1xf32>
    %93 = tpu.reciprocal %92 {approx = true} : vector<8x1xf32> -> vector<8x1xf32>
    %94 = vector.broadcast %93 : vector<8x1xf32> to vector<8x8xf32>
    %95 = arith.mulf %90, %94 : vector<8x8xf32>
    %cst_39 = arith.constant dense<0.000000e+00> : vector<8x8xf32>
    %96 = tpu.matmul %95, %80, %cst_39 {dimension_numbers = #tpu.dot_dimension_numbers<[1], [0], [0], [1], [0, 0, 1, 1], [], []>} : vector<8x8xf32>, vector<8x8xf32>, vector<8x8xf32> -> vector<8x8xf32>
    %c0_40 = arith.constant 0 : index
    %c24 = arith.constant 24 : index
    %97 = vector.load %arg17[%c0_40, %c24] : memref<8x32xf32, #tpu.memory_space<vmem>>, vector<8x8xf32>
    tpu.vector_store %arg17[%c0_40, %c24], %96 {strides = array<i32>} : memref<8x32xf32, #tpu.memory_space<vmem>>, vector<8x8xf32>,
    %c0_41 = arith.constant 0 : index
    %c0_42 = arith.constant 0 : index
    %98 = vector.load %arg17[%c0_41, %c0_42] : memref<8x32xf32, #tpu.memory_space<vmem>>, vector<8x32xf32>
    %c0_43 = arith.constant 0 : index
    %c0_44 = arith.constant 0 : index
    %99 = vector.load %arg12[%c0_43, %c0_44] : memref<32x32xf32, #tpu.memory_space<vmem>>, vector<32x32xf32>
    %cst_45 = arith.constant dense<0.000000e+00> : vector<8x32xf32>
    %100 = tpu.matmul %98, %99, %cst_45 {dimension_numbers = #tpu.dot_dimension_numbers<[1], [0], [0], [1], [0, 0, 1, 1], [], []>} : vector<8x32xf32>, vector<32x32xf32>, vector<8x32xf32> -> vector<8x32xf32>
    %c0_46 = arith.constant 0 : index
    %c0_47 = arith.constant 0 : index
    %101 = vector.load %arg13[%c0_46, %c0_47] : memref<1x32xf32, #tpu.memory_space<vmem>>, vector<1x32xf32>
    %102 = vector.broadcast %101 : vector<1x32xf32> to vector<8x32xf32>
    %103 = arith.addf %100, %102 : vector<8x32xf32>
    %c0_48 = arith.constant 0 : index
    %c0_49 = arith.constant 0 : index
    %c0_50 = arith.constant 0 : index
    %104 = vector.load %arg14[%c0_48, %c0_49, %c0_50] : memref<1x8x32xf32, #tpu.memory_space<vmem>>, vector<1x8x32xf32>
    %105 = vector.shape_cast %104 : vector<1x8x32xf32> to vector<8x32xf32>
    %106 = vector.shape_cast %103 : vector<8x32xf32> to vector<1x8x32xf32>
    tpu.vector_store %arg14[%c0_48, %c0_49, %c0_50], %106 {strides = array<i32>} : memref<1x8x32xf32, #tpu.memory_space<vmem>>, vector<1x8x32xf32>,
    return
  }
  func.func @transform_0(%arg0: i32, %arg1: i32) -> (i32, i32, i32) {
    %c0_i32 = arith.constant 0 : i32
    %c0_i32_0 = arith.constant 0 : i32
    return %arg0, %arg1, %c0_i32 : i32, i32, i32
  }
  func.func @transform_1(%arg0: i32, %arg1: i32) -> (i32, i32, i32) {
    %c0_i32 = arith.constant 0 : i32
    %c0_i32_0 = arith.constant 0 : i32
    %c0_i32_1 = arith.constant 0 : i32
    return %arg0, %c0_i32, %c0_i32_0 : i32, i32, i32
  }
  func.func @transform_2(%arg0: i32, %arg1: i32) -> (i32, i32, i32) {
    %c0_i32 = arith.constant 0 : i32
    %c0_i32_0 = arith.constant 0 : i32
    %c0_i32_1 = arith.constant 0 : i32
    return %arg0, %c0_i32, %c0_i32_0 : i32, i32, i32
  }
  func.func @transform_3(%arg0: i32, %arg1: i32) -> (i32, i32, i32) {
    %c0_i32 = arith.constant 0 : i32
    %c0_i32_0 = arith.constant 0 : i32
    %c0_i32_1 = arith.constant 0 : i32
    return %arg0, %c0_i32, %c0_i32_0 : i32, i32, i32
  }
  func.func @transform_4(%arg0: i32, %arg1: i32) -> (i32, i32) {
    %c0_i32 = arith.constant 0 : i32
    %c0_i32_0 = arith.constant 0 : i32
    %c0_i32_1 = arith.constant 0 : i32
    return %c0_i32, %c0_i32_0 : i32, i32
  }
  func.func @transform_5(%arg0: i32, %arg1: i32) -> (i32, i32) {
    %c0_i32 = arith.constant 0 : i32
    %c0_i32_0 = arith.constant 0 : i32
    %c0_i32_1 = arith.constant 0 : i32
    return %c0_i32, %c0_i32_0 : i32, i32
  }
  func.func @transform_6(%arg0: i32, %arg1: i32) -> (i32, i32) {
    %c0_i32 = arith.constant 0 : i32
    %c0_i32_0 = arith.constant 0 : i32
    %c0_i32_1 = arith.constant 0 : i32
    return %c0_i32, %c0_i32_0 : i32, i32
  }
  func.func @transform_7(%arg0: i32, %arg1: i32) -> (i32, i32) {
    %c0_i32 = arith.constant 0 : i32
    %c0_i32_0 = arith.constant 0 : i32
    %c0_i32_1 = arith.constant 0 : i32
    return %c0_i32, %c0_i32_0 : i32, i32
  }
  func.func @transform_8(%arg0: i32, %arg1: i32) -> (i32, i32) {
    %c0_i32 = arith.constant 0 : i32
    %c0_i32_0 = arith.constant 0 : i32
    %c0_i32_1 = arith.constant 0 : i32
    return %c0_i32, %c0_i32_0 : i32, i32
  }
  func.func @transform_9(%arg0: i32, %arg1: i32) -> (i32, i32) {
    %c0_i32 = arith.constant 0 : i32
    %c0_i32_0 = arith.constant 0 : i32
    %c0_i32_1 = arith.constant 0 : i32
    return %c0_i32, %c0_i32_0 : i32, i32
  }
  func.func @transform_10(%arg0: i32, %arg1: i32) -> (i32, i32) {
    %c0_i32 = arith.constant 0 : i32
    %c0_i32_0 = arith.constant 0 : i32
    %c0_i32_1 = arith.constant 0 : i32
    return %c0_i32, %c0_i32_0 : i32, i32
  }
  func.func @transform_11(%arg0: i32, %arg1: i32) -> (i32, i32) {
    %c0_i32 = arith.constant 0 : i32
    %c0_i32_0 = arith.constant 0 : i32
    %c0_i32_1 = arith.constant 0 : i32
    return %c0_i32, %c0_i32_0 : i32, i32
  }
  func.func @transform_12(%arg0: i32, %arg1: i32) -> (i32, i32, i32) {
    %c0_i32 = arith.constant 0 : i32
    %c0_i32_0 = arith.constant 0 : i32
    return %arg0, %arg1, %c0_i32 : i32, i32, i32
  }
}

</mosaic_0001>

<llo_original>
// kernel: mha_forward.1
$region0: #{mha_forward.1}
  #allocation0 [shape = 'u32[]', space=smem, size = 0x4, offset = 0x4, fixed_abs, tag = 'smem constant byte address 0x4 - core index']
  #allocation1 [shape = 'u32[144,128]{1,0:T(1,128)}', space=vmem, size = 0x12000, scoped, tag = 'internal scratch']
  #allocation2 [shape = 'f32[8,32]{1,0:T(8,128)}', space=vmem, size = 0x1000, scoped, tag = 'scratch operand']
  #allocation3 [shape = 'f32[8,32]{1,0:T(8,128)}', space=vmem, size = 0x1000, scoped, tag = 'scratch operand']
  #allocation4 [shape = 'f32[8,32]{1,0:T(8,128)}', space=vmem, size = 0x1000, scoped, tag = 'scratch operand']
  %s0 = inlined_call_operand.vmem [shape: f32[2,8,32], index: 0, kind: input, shape index: {}]
  %s1 = inlined_call_operand.vmem [shape: f32[2,8,32], index: 1, kind: input, shape index: {}]
  %s2 = inlined_call_operand.vmem [shape: f32[2,8,32], index: 2, kind: input, shape index: {}]
  %s3 = inlined_call_operand.vmem [shape: s32[2,1,8], index: 3, kind: input, shape index: {}]
  %s4 = inlined_call_operand.vmem [shape: f32[32,32], index: 4, kind: input, shape index: {}]
  %s5 = inlined_call_operand.vmem [shape: f32[1,32], index: 5, kind: input, shape index: {}]
  %s6 = inlined_call_operand.vmem [shape: f32[32,32], index: 6, kind: input, shape index: {}]
  %s7 = inlined_call_operand.vmem [shape: f32[1,32], index: 7, kind: input, shape index: {}]
  %s8 = inlined_call_operand.vmem [shape: f32[32,32], index: 8, kind: input, shape index: {}]
  %s9 = inlined_call_operand.vmem [shape: f32[1,32], index: 9, kind: input, shape index: {}]
  %s10 = inlined_call_operand.vmem [shape: f32[32,32], index: 10, kind: input, shape index: {}]
  %s11 = inlined_call_operand.vmem [shape: f32[1,32], index: 11, kind: input, shape index: {}]
  %s12 = inlined_call_operand.hbm [shape: f32[2,8,32], index: 12, kind: output, shape index: {}]
  %s13 = sld [smem:[#allocation0]]
  $region85: #{mha_forward.1} parent=0
    _
  %s15 = ssub.s32 1, %s13
  %s16 = scalar_select 0, %s15, %s13
  $region1: #{mha_forward.1} parent=0
    #allocation5 [shape = 'u8[8192]{0}', space=vmem, size = 0x2000, scoped, tag = 'output window, operand 0']
    #allocation6 [shape = 's32[2]{0}', space=sflag, size = 0x8, scoped, tag = 'scoped memory for mha_forward.1']
    %17 = vsyncpa [#allocation6], 0
    %s18 = scalar_lea.sflag [#allocation6], 1
    %19 = vsyncpa %s18, 0
    loop: start=0, step=1, limit=4
    $region2: #{mha_forward.1} parent=1 // loop_pre_header
      _
    $region3: #{mha_forward.1} parent=1 // loop_header
      %s21 = sphi 0, %s25
      %p22 = scmp.ge.s32.totalorder %s21, 4
      %s28 = sphi 0, %s40
      %s29 = sphi 0, %s36
      %s30 = sphi 0, %s28
      %s31 = sphi 0, %s29
      %s32 = sphi 0, %s30
      %s33 = sphi 0, %s31
      %s45 = sphi 0, %s47
      %s48 = sphi 0, %s45
      %s49 = sphi 0, %s48
      %s65 = sphi 0, %s49
      %s71 = sphi 0, %s73
      %s74 = sphi 0, %s71
      %s75 = sphi 0, %s74
      %s91 = sphi 0, %s75
      %s97 = sphi 0, %s99
      %s100 = sphi 0, %s97
      %s101 = sphi 0, %s100
      %s117 = sphi 0, %s101
      %s123 = sphi 0, %s125
      %s126 = sphi 0, %s123
      %s127 = sphi 0, %s126
      %s143 = sphi 0, %s127
      %s147 = sphi 0, %s147
      %s149 = sphi 0, %s147
      %s150 = sphi 0, %s149
      %s164 = sphi 0, %s150
      %s168 = sphi 0, %s168
      %s170 = sphi 0, %s168
      %s171 = sphi 0, %s170
      %s185 = sphi 0, %s171
      %s189 = sphi 0, %s189
      %s191 = sphi 0, %s189
      %s192 = sphi 0, %s191
      %s206 = sphi 0, %s192
      %s210 = sphi 0, %s210
      %s212 = sphi 0, %s210
      %s213 = sphi 0, %s212
      %s227 = sphi 0, %s213
      %s231 = sphi 0, %s231
      %s233 = sphi 0, %s231
      %s234 = sphi 0, %s233
      %s248 = sphi 0, %s234
      %s252 = sphi 0, %s252
      %s254 = sphi 0, %s252
      %s255 = sphi 0, %s254
      %s269 = sphi 0, %s255
      %s273 = sphi 0, %s273
      %s275 = sphi 0, %s273
      %s276 = sphi 0, %s275
      %s290 = sphi 0, %s276
      %s294 = sphi 0, %s294
      %s296 = sphi 0, %s294
      %s297 = sphi 0, %s296
      %s311 = sphi 0, %s297
      %s319 = sphi 0, %s321
      %s322 = sphi 0, %s319
      %s323 = sphi 0, %s322
      %s339 = sphi 0, %s323
    $region4: #{mha_forward.1} parent=1 // loop_header_branch
      %24 = sbr.rel (%p22) target = $region8
    $region5: #{mha_forward.1} parent=1 // loop_body
      %s26 = ssub.s32 %s21, 1
      %s27 = ssub.s32 %s21, 2
      %s34 = sadd.s32 1, %s29
      %p35 = scmp.ge.s32.totalorder %s34, 1
      %s36 = scalar_select %p35, 0, %s34
      %s37 = sadd.s32 1, %s28
      %s38 = scalar_select %p35, %s37, %s28
      %p39 = scmp.ge.s32.totalorder %s38, 2
      %s40 = scalar_select %p39, 0, %s38
      %s41 = ssub.s32 %s28, %s40
      %s42 = ssub.s32 %s29, %s36
      %s43 = sor.u32 %s41, %s42
      %p44 = scmp.eq.s32.totalorder %s43, 0
      %s46 = sadd.s32 %s45, 1
      %s47 = scalar_select %p44, %s45, %s46
      %p50 = pneg %p44
      %p51 = scmp.eq.s32.totalorder %s21, 1
      %p52 = por %p50, %p51
      %p53 = scmp.ne.s32.totalorder %s45, %s48
      %p54 = scmp.eq.s32.totalorder %s21, 0
      %p55 = por %p53, %p54
      %p56 = scmp.ne.s32.totalorder %s45, %s48
      %p57 = scmp.eq.s32.totalorder %s26, 1
      %p58 = por %p56, %p57
      %p59 = scmp.ne.s32.totalorder %s48, %s49
      %p60 = scmp.eq.s32.totalorder %s26, 0
      %p61 = por %p59, %p60
      %p62 = scmp.ne.s32.totalorder %s48, %s49
      %p63 = scmp.eq.s32.totalorder %s27, 1
      %p64 = por %p62, %p63
      %p66 = scmp.ne.s32.totalorder %s49, %s65
      %p67 = scmp.eq.s32.totalorder %s27, 0
      %p68 = por %p66, %p67
      %s69 = ssub.s32 %s28, %s40
      %p70 = scmp.eq.s32.totalorder %s69, 0
      %s72 = sadd.s32 %s71, 1
      %s73 = scalar_select %p70, %s71, %s72
      %p76 = pneg %p70
      %p77 = scmp.eq.s32.totalorder %s21, 1
      %p78 = por %p76, %p77
      %p79 = scmp.ne.s32.totalorder %s71, %s74
      %p80 = scmp.eq.s32.totalorder %s21, 0
      %p81 = por %p79, %p80
      %p82 = scmp.ne.s32.totalorder %s71, %s74
      %p83 = scmp.eq.s32.totalorder %s26, 1
      %p84 = por %p82, %p83
      %p85 = scmp.ne.s32.totalorder %s74, %s75
      %p86 = scmp.eq.s32.totalorder %s26, 0
      %p87 = por %p85, %p86
      %p88 = scmp.ne.s32.totalorder %s74, %s75
      %p89 = scmp.eq.s32.totalorder %s27, 1
      %p90 = por %p88, %p89
      %p92 = scmp.ne.s32.totalorder %s75, %s91
      %p93 = scmp.eq.s32.totalorder %s27, 0
      %p94 = por %p92, %p93
      %s95 = ssub.s32 %s28, %s40
      %p96 = scmp.eq.s32.totalorder %s95, 0
      %s98 = sadd.s32 %s97, 1
      %s99 = scalar_select %p96, %s97, %s98
      %p102 = pneg %p96
      %p103 = scmp.eq.s32.totalorder %s21, 1
      %p104 = por %p102, %p103
      %p105 = scmp.ne.s32.totalorder %s97, %s100
      %p106 = scmp.eq.s32.totalorder %s21, 0
      %p107 = por %p105, %p106
      %p108 = scmp.ne.s32.totalorder %s97, %s100
      %p109 = scmp.eq.s32.totalorder %s26, 1
      %p110 = por %p108, %p109
      %p111 = scmp.ne.s32.totalorder %s100, %s101
      %p112 = scmp.eq.s32.totalorder %s26, 0
      %p113 = por %p111, %p112
      %p114 = scmp.ne.s32.totalorder %s100, %s101
      %p115 = scmp.eq.s32.totalorder %s27, 1
      %p116 = por %p114, %p115
      %p118 = scmp.ne.s32.totalorder %s101, %s117
      %p119 = scmp.eq.s32.totalorder %s27, 0
      %p120 = por %p118, %p119
      %s121 = ssub.s32 %s28, %s40
      %p122 = scmp.eq.s32.totalorder %s121, 0
      %s124 = sadd.s32 %s123, 1
      %s125 = scalar_select %p122, %s123, %s124
      %p128 = pneg %p122
      %p129 = scmp.eq.s32.totalorder %s21, 1
      %p130 = por %p128, %p129
      %p131 = scmp.ne.s32.totalorder %s123, %s126
      %p132 = scmp.eq.s32.totalorder %s21, 0
      %p133 = por %p131, %p132
      %p134 = scmp.ne.s32.totalorder %s123, %s126
      %p135 = scmp.eq.s32.totalorder %s26, 1
      %p136 = por %p134, %p135
      %p137 = scmp.ne.s32.totalorder %s126, %s127
      %p138 = scmp.eq.s32.totalorder %s26, 0
      %p139 = por %p137, %p138
      %p140 = scmp.ne.s32.totalorder %s126, %s127
      %p141 = scmp.eq.s32.totalorder %s27, 1
      %p142 = por %p140, %p141
      %p144 = scmp.ne.s32.totalorder %s127, %s143
      %p145 = scmp.eq.s32.totalorder %s27, 0
      %p146 = por %p144, %p145
      %s148 = sadd.s32 %s147, 1
      %p151 = scmp.eq.s32.totalorder %s21, 1
      %p152 = scmp.ne.s32.totalorder %s147, %s149
      %p153 = scmp.eq.s32.totalorder %s21, 0
      %p154 = por %p152, %p153
      %p155 = scmp.ne.s32.totalorder %s147, %s149
      %p156 = scmp.eq.s32.totalorder %s26, 1
      %p157 = por %p155, %p156
      %p158 = scmp.ne.s32.totalorder %s149, %s150
      %p159 = scmp.eq.s32.totalorder %s26, 0
      %p160 = por %p158, %p159
      %p161 = scmp.ne.s32.totalorder %s149, %s150
      %p162 = scmp.eq.s32.totalorder %s27, 1
      %p163 = por %p161, %p162
      %p165 = scmp.ne.s32.totalorder %s150, %s164
      %p166 = scmp.eq.s32.totalorder %s27, 0
      %p167 = por %p165, %p166
      %s169 = sadd.s32 %s168, 1
      %p172 = scmp.eq.s32.totalorder %s21, 1
      %p173 = scmp.ne.s32.totalorder %s168, %s170
      %p174 = scmp.eq.s32.totalorder %s21, 0
      %p175 = por %p173, %p174
      %p176 = scmp.ne.s32.totalorder %s168, %s170
      %p177 = scmp.eq.s32.totalorder %s26, 1
      %p178 = por %p176, %p177
      %p179 = scmp.ne.s32.totalorder %s170, %s171
      %p180 = scmp.eq.s32.totalorder %s26, 0
      %p181 = por %p179, %p180
      %p182 = scmp.ne.s32.totalorder %s170, %s171
      %p183 = scmp.eq.s32.totalorder %s27, 1
      %p184 = por %p182, %p183
      %p186 = scmp.ne.s32.totalorder %s171, %s185
      %p187 = scmp.eq.s32.totalorder %s27, 0
      %p188 = por %p186, %p187
      %s190 = sadd.s32 %s189, 1
      %p193 = scmp.eq.s32.totalorder %s21, 1
      %p194 = scmp.ne.s32.totalorder %s189, %s191
      %p195 = scmp.eq.s32.totalorder %s21, 0
      %p196 = por %p194, %p195
      %p197 = scmp.ne.s32.totalorder %s189, %s191
      %p198 = scmp.eq.s32.totalorder %s26, 1
      %p199 = por %p197, %p198
      %p200 = scmp.ne.s32.totalorder %s191, %s192
      %p201 = scmp.eq.s32.totalorder %s26, 0
      %p202 = por %p200, %p201
      %p203 = scmp.ne.s32.totalorder %s191, %s192
      %p204 = scmp.eq.s32.totalorder %s27, 1
      %p205 = por %p203, %p204
      %p207 = scmp.ne.s32.totalorder %s192, %s206
      %p208 = scmp.eq.s32.totalorder %s27, 0
      %p209 = por %p207, %p208
      %s211 = sadd.s32 %s210, 1
      %p214 = scmp.eq.s32.totalorder %s21, 1
      %p215 = scmp.ne.s32.totalorder %s210, %s212
      %p216 = scmp.eq.s32.totalorder %s21, 0
      %p217 = por %p215, %p216
      %p218 = scmp.ne.s32.totalorder %s210, %s212
      %p219 = scmp.eq.s32.totalorder %s26, 1
      %p220 = por %p218, %p219
      %p221 = scmp.ne.s32.totalorder %s212, %s213
      %p222 = scmp.eq.s32.totalorder %s26, 0
      %p223 = por %p221, %p222
      %p224 = scmp.ne.s32.totalorder %s212, %s213
      %p225 = scmp.eq.s32.totalorder %s27, 1
      %p226 = por %p224, %p225
      %p228 = scmp.ne.s32.totalorder %s213, %s227
      %p229 = scmp.eq.s32.totalorder %s27, 0
      %p230 = por %p228, %p229
      %s232 = sadd.s32 %s231, 1
      %p235 = scmp.eq.s32.totalorder %s21, 1
      %p236 = scmp.ne.s32.totalorder %s231, %s233
      %p237 = scmp.eq.s32.totalorder %s21, 0
      %p238 = por %p236, %p237
      %p239 = scmp.ne.s32.totalorder %s231, %s233
      %p240 = scmp.eq.s32.totalorder %s26, 1
      %p241 = por %p239, %p240
      %p242 = scmp.ne.s32.totalorder %s233, %s234
      %p243 = scmp.eq.s32.totalorder %s26, 0
      %p244 = por %p242, %p243
      %p245 = scmp.ne.s32.totalorder %s233, %s234
      %p246 = scmp.eq.s32.totalorder %s27, 1
      %p247 = por %p245, %p246
      %p249 = scmp.ne.s32.totalorder %s234, %s248
      %p250 = scmp.eq.s32.totalorder %s27, 0
      %p251 = por %p249, %p250
      %s253 = sadd.s32 %s252, 1
      %p256 = scmp.eq.s32.totalorder %s21, 1
      %p257 = scmp.ne.s32.totalorder %s252, %s254
      %p258 = scmp.eq.s32.totalorder %s21, 0
      %p259 = por %p257, %p258
      %p260 = scmp.ne.s32.totalorder %s252, %s254
      %p261 = scmp.eq.s32.totalorder %s26, 1
      %p262 = por %p260, %p261
      %p263 = scmp.ne.s32.totalorder %s254, %s255
      %p264 = scmp.eq.s32.totalorder %s26, 0
      %p265 = por %p263, %p264
      %p266 = scmp.ne.s32.totalorder %s254, %s255
      %p267 = scmp.eq.s32.totalorder %s27, 1
      %p268 = por %p266, %p267
      %p270 = scmp.ne.s32.totalorder %s255, %s269
      %p271 = scmp.eq.s32.totalorder %s27, 0
      %p272 = por %p270, %p271
      %s274 = sadd.s32 %s273, 1
      %p277 = scmp.eq.s32.totalorder %s21, 1
      %p278 = scmp.ne.s32.totalorder %s273, %s275
      %p279 = scmp.eq.s32.totalorder %s21, 0
      %p280 = por %p278, %p279
      %p281 = scmp.ne.s32.totalorder %s273, %s275
      %p282 = scmp.eq.s32.totalorder %s26, 1
      %p283 = por %p281, %p282
      %p284 = scmp.ne.s32.totalorder %s275, %s276
      %p285 = scmp.eq.s32.totalorder %s26, 0
      %p286 = por %p284, %p285
      %p287 = scmp.ne.s32.totalorder %s275, %s276
      %p288 = scmp.eq.s32.totalorder %s27, 1
      %p289 = por %p287, %p288
      %p291 = scmp.ne.s32.totalorder %s276, %s290
      %p292 = scmp.eq.s32.totalorder %s27, 0
      %p293 = por %p291, %p292
      %s295 = sadd.s32 %s294, 1
      %p298 = scmp.eq.s32.totalorder %s21, 1
      %p299 = scmp.ne.s32.totalorder %s294, %s296
      %p300 = scmp.eq.s32.totalorder %s21, 0
      %p301 = por %p299, %p300
      %p302 = scmp.ne.s32.totalorder %s294, %s296
      %p303 = scmp.eq.s32.totalorder %s26, 1
      %p304 = por %p302, %p303
      %p305 = scmp.ne.s32.totalorder %s296, %s297
      %p306 = scmp.eq.s32.totalorder %s26, 0
      %p307 = por %p305, %p306
      %p308 = scmp.ne.s32.totalorder %s296, %s297
      %p309 = scmp.eq.s32.totalorder %s27, 1
      %p310 = por %p308, %p309
      %p312 = scmp.ne.s32.totalorder %s297, %s311
      %p313 = scmp.eq.s32.totalorder %s27, 0
      %p314 = por %p312, %p313
      %s315 = ssub.s32 %s28, %s40
      %s316 = ssub.s32 %s29, %s36
      %s317 = sor.u32 %s315, %s316
      %p318 = scmp.eq.s32.totalorder %s317, 0
      %s320 = sadd.s32 %s319, 1
      %s321 = scalar_select %p318, %s319, %s320
      %p324 = pneg %p318
      %p325 = scmp.eq.s32.totalorder %s21, 1
      %p326 = por %p324, %p325
      %p327 = scmp.ne.s32.totalorder %s319, %s322
      %p328 = scmp.eq.s32.totalorder %s21, 0
      %p329 = por %p327, %p328
      %p330 = scmp.ne.s32.totalorder %s319, %s322
      %p331 = scmp.eq.s32.totalorder %s26, 1
      %p332 = por %p330, %p331
      %p333 = scmp.ne.s32.totalorder %s322, %s323
      %p334 = scmp.eq.s32.totalorder %s26, 0
      %p335 = por %p333, %p334
      %p336 = scmp.ne.s32.totalorder %s322, %s323
      %p337 = scmp.eq.s32.totalorder %s27, 1
      %p338 = por %p336, %p337
      %p340 = scmp.ne.s32.totalorder %s323, %s339
      %p341 = scmp.eq.s32.totalorder %s27, 0
      %p342 = por %p340, %p341
      %p343 = scmp.le.s32.totalorder 1, %s21
      %p344 = scmp.lt.s32.totalorder %s21, 3
      %p345 = pnand %p343, %p344
      %p346 = pneg %p345
      // Predicated region
      $region9: #{mha_forward.1} parent=5 // pred_check
        _
      $region10: #{mha_forward.1} parent=5 // pred_check_branch
        %348 = sbr.rel (%p345) target = $region12
      $region11: #{mha_forward.1} parent=5 // pred_region
        %s349 = ssub.s32 %s21, 1
        // Predicated region
        $region13: #{mha_forward.1} parent=11 // pred_check
          %p350 = pneg %p160
        $region14: #{mha_forward.1} parent=11 // pred_check_branch
          %352 = sbr.rel (%p350) target = $region16
        $region15: #{mha_forward.1} parent=11 // pred_region
          _
        $region16: #{mha_forward.1} parent=11 // pred_fallthru
          _
        // Predicated region
        $region17: #{mha_forward.1} parent=11 // pred_check
          %p353 = pneg %p181
        $region18: #{mha_forward.1} parent=11 // pred_check_branch
          %355 = sbr.rel (%p353) target = $region20
        $region19: #{mha_forward.1} parent=11 // pred_region
          _
        $region20: #{mha_forward.1} parent=11 // pred_fallthru
          _
        // Predicated region
        $region21: #{mha_forward.1} parent=11 // pred_check
          %p356 = pneg %p202
        $region22: #{mha_forward.1} parent=11 // pred_check_branch
          %358 = sbr.rel (%p356) target = $region24
        $region23: #{mha_forward.1} parent=11 // pred_region
          _
        $region24: #{mha_forward.1} parent=11 // pred_fallthru
          _
        // Predicated region
        $region25: #{mha_forward.1} parent=11 // pred_check
          %p359 = pneg %p223
        $region26: #{mha_forward.1} parent=11 // pred_check_branch
          %361 = sbr.rel (%p359) target = $region28
        $region27: #{mha_forward.1} parent=11 // pred_region
          _
        $region28: #{mha_forward.1} parent=11 // pred_fallthru
          _
        // Predicated region
        $region29: #{mha_forward.1} parent=11 // pred_check
          %p362 = pneg %p244
        $region30: #{mha_forward.1} parent=11 // pred_check_branch
          %364 = sbr.rel (%p362) target = $region32
        $region31: #{mha_forward.1} parent=11 // pred_region
          _
        $region32: #{mha_forward.1} parent=11 // pred_fallthru
          _
        // Predicated region
        $region33: #{mha_forward.1} parent=11 // pred_check
          %p365 = pneg %p265
        $region34: #{mha_forward.1} parent=11 // pred_check_branch
          %367 = sbr.rel (%p365) target = $region36
        $region35: #{mha_forward.1} parent=11 // pred_region
          _
        $region36: #{mha_forward.1} parent=11 // pred_fallthru
          _
        // Predicated region
        $region37: #{mha_forward.1} parent=11 // pred_check
          %p368 = pneg %p286
        $region38: #{mha_forward.1} parent=11 // pred_check_branch
          %370 = sbr.rel (%p368) target = $region40
        $region39: #{mha_forward.1} parent=11 // pred_region
          _
        $region40: #{mha_forward.1} parent=11 // pred_fallthru
          _
        // Predicated region
        $region41: #{mha_forward.1} parent=11 // pred_check
          %p371 = pneg %p307
        $region42: #{mha_forward.1} parent=11 // pred_check_branch
          %373 = sbr.rel (%p371) target = $region44
        $region43: #{mha_forward.1} parent=11 // pred_region
          _
        $region44: #{mha_forward.1} parent=11 // pred_fallthru
          _
      $region12: #{mha_forward.1} parent=5 // pred_fallthru
        _
      %p374 = scmp.lt.s32.totalorder %s21, 2
      // Predicated region
      $region45: #{mha_forward.1} parent=5 // pred_check
        %p375 = pneg %p374
      $region46: #{mha_forward.1} parent=5 // pred_check_branch
        %377 = sbr.rel (%p375) target = $region48
      $region47: #{mha_forward.1} parent=5 // pred_region
        // Predicated region
        $region49: #{mha_forward.1} parent=47 // pred_check
          %p378 = pneg %p55
        $region50: #{mha_forward.1} parent=47 // pred_check_branch
          %380 = sbr.rel (%p378) target = $region52
        $region51: #{mha_forward.1} parent=47 // pred_region
          %p381 = scmp.lt.s32.totalorder %s28, 1
          %s382 = scalar_select %p381, %s28, 1
          %p383 = scmp.lt.s32.totalorder %s29, 0
          %s384 = scalar_select %p383, %s29, 0
          %s385 = sadd.s32 %s384, %s382
          %s386 = smul.addr %s385, 8
          %s387 = scalar_lea.vmem %s0, %s386
        $region52: #{mha_forward.1} parent=47 // pred_fallthru
          _
        // Predicated region
        $region53: #{mha_forward.1} parent=47 // pred_check
          %p388 = pneg %p81
        $region54: #{mha_forward.1} parent=47 // pred_check_branch
          %390 = sbr.rel (%p388) target = $region56
        $region55: #{mha_forward.1} parent=47 // pred_region
          %p391 = scmp.lt.s32.totalorder %s28, 1
          %s392 = scalar_select %p391, %s28, 1
          %s393 = smul.addr %s392, 8
          %s394 = scalar_lea.vmem %s1, %s393
        $region56: #{mha_forward.1} parent=47 // pred_fallthru
          _
        // Predicated region
        $region57: #{mha_forward.1} parent=47 // pred_check
          %p395 = pneg %p107
        $region58: #{mha_forward.1} parent=47 // pred_check_branch
          %397 = sbr.rel (%p395) target = $region60
        $region59: #{mha_forward.1} parent=47 // pred_region
          %p398 = scmp.lt.s32.totalorder %s28, 1
          %s399 = scalar_select %p398, %s28, 1
          %s400 = smul.addr %s399, 8
          %s401 = scalar_lea.vmem %s2, %s400
        $region60: #{mha_forward.1} parent=47 // pred_fallthru
          _
        // Predicated region
        $region61: #{mha_forward.1} parent=47 // pred_check
          %p402 = pneg %p133
        $region62: #{mha_forward.1} parent=47 // pred_check_branch
          %404 = sbr.rel (%p402) target = $region64
        $region63: #{mha_forward.1} parent=47 // pred_region
          %p405 = scmp.lt.s32.totalorder %s28, 1
          %s406 = scalar_select %p405, %s28, 1
          %s407 = scalar_lea.vmem %s3, %s406
        $region64: #{mha_forward.1} parent=47 // pred_fallthru
          _
      $region48: #{mha_forward.1} parent=5 // pred_fallthru
        _
      %p408 = scmp.le.s32.totalorder 1, %s21
      %p409 = scmp.lt.s32.totalorder %s21, 3
      %p410 = pnand %p408, %p409
      %p411 = pneg %p410
      // Predicated region
      $region65: #{mha_forward.1} parent=5 // pred_check
        _
      $region66: #{mha_forward.1} parent=5 // pred_check_branch
        %413 = sbr.rel (%p410) target = $region68
      $region67: #{mha_forward.1} parent=5 // pred_region
        %s414 = ssub.s32 %s21, 1
        %p415 = scmp.lt.s32.totalorder %s30, 1
        %s416 = scalar_select %p415, %s30, 1
        %p417 = scmp.lt.s32.totalorder %s31, 0
        %s418 = scalar_select %p417, %s31, 0
        %s419 = sadd.s32 %s418, %s416
        %s420 = smul.addr %s419, 8
        %s421 = scalar_lea.vmem %s0, %s420
        %p422 = pneg %p61
        %p423 = pneg %p58
        %p424 = scmp.lt.s32.totalorder %s30, 1
        %s425 = scalar_select %p424, %s30, 1
        %s426 = smul.addr %s425, 8
        %s427 = scalar_lea.vmem %s1, %s426
        %p428 = pneg %p87
        %p429 = pneg %p84
        %p430 = scmp.lt.s32.totalorder %s30, 1
        %s431 = scalar_select %p430, %s30, 1
        %s432 = smul.addr %s431, 8
        %s433 = scalar_lea.vmem %s2, %s432
        %p434 = pneg %p113
        %p435 = pneg %p110
        %p436 = scmp.lt.s32.totalorder %s30, 1
        %s437 = scalar_select %p436, %s30, 1
        %s438 = scalar_lea.vmem %s3, %s437
        %p439 = pneg %p139
        %p440 = pneg %p136
        %p441 = pneg %p160
        %p442 = pneg %p157
        %p443 = pneg %p181
        %p444 = pneg %p178
        %p445 = pneg %p202
        %p446 = pneg %p199
        %p447 = pneg %p223
        %p448 = pneg %p220
        %p449 = pneg %p244
        %p450 = pneg %p241
        %p451 = pneg %p265
        %p452 = pneg %p262
        %p453 = pneg %p286
        %p454 = pneg %p283
        %p455 = pneg %p307
        %p456 = pneg %p304
        %p457 = pneg %p335
        %p458 = pneg %p332
        %s459 = sand.u32 %s322, 1
        %s460 = scalar_lea.sflag [#allocation6], %s459
        %s461 = sand.u32 %s322, 1
        %s462 = smul.addr %s461, 8
        %s463 = scalar_lea.vmem [#allocation5], %s462
        %p464 = scmp.lt.s32.totalorder %s30, 1
        %s465 = scalar_select %p464, %s30, 1
        %p466 = scmp.lt.s32.totalorder %s31, 0
        %s467 = scalar_select %p466, %s31, 0
        %s468 = sadd.s32 %s467, %s465
        %s469 = smul.addr %s468, 8
        %s470 = scalar_lea.vmem %s0, %s469
        %p471 = scmp.lt.s32.totalorder %s30, 1
        %s472 = scalar_select %p471, %s30, 1
        %s473 = smul.addr %s472, 8
        %s474 = scalar_lea.vmem %s1, %s473
        %p475 = scmp.lt.s32.totalorder %s30, 1
        %s476 = scalar_select %p475, %s30, 1
        %s477 = smul.addr %s476, 8
        %s478 = scalar_lea.vmem %s2, %s477
        %p479 = scmp.lt.s32.totalorder %s30, 1
        %s480 = scalar_select %p479, %s30, 1
        %s481 = scalar_lea.vmem %s3, %s480
        %p482 = scmp.eq.s32.totalorder %s31, 0
        // Predicated region
        $region69: #{mha_forward.1} parent=67 // pred_check
          %p483 = pneg %p482
        $region70: #{mha_forward.1} parent=67 // pred_check_branch
          %485 = sbr.rel (%p483) target = $region72
        $region71: #{mha_forward.1} parent=67 // pred_region
          %v486 = vld [vmem:[%s474] sm:$0xff]
          %v487 = vld [vmem:[%s6] sm:$0xff]
          %v488 = vld [vmem:[%s6 + $0x8] sm:$0xff]
          %v489 = vld [vmem:[%s6 + $0x10] sm:$0xff]
          %v490 = vld [vmem:[%s6 + $0x18] sm:$0xff]
          %v491 = vld [vmem:[%s7] sm:$0x1]
          %v493 = vlaneseq
          %v494 = vshrl.u32 %v493, 7
          %v495 = vsub.s32 0, %v494
          %v496 = vrot.slane %v491, %v495
          %vm498 = vcmask 261120
          %v500 = vsel %vm498, %v486, 0
          %502 = vmatprep.subr.mxu0 0.0
          %503 = vmatpush1.msra.mxu0 0.0
          %504 = vmatprep.subr.mxu0 0.0
          %505 = vmatpush1.msra.mxu0 0.0
          %506 = vmatprep.subr.mxu0 0.0
          %507 = vmatpush1.msra.mxu0 0.0
          %508 = vmatprep.subr.mxu0 0.0
          %509 = vmatpush1.msra.mxu0 0.0
          %510 = vmatprep.subr.mxu0 0.0
          %511 = vmatpush1.msra.mxu0 0.0
          %512 = vmatprep.subr.mxu0 0.0
          %513 = vmatpush1.msra.mxu0 0.0
          %514 = vmatprep.subr.mxu0 0.0
          %515 = vmatpush1.msra.mxu0 0.0
          %516 = vmatprep.subr.mxu0 0.0
          %517 = vmatpush1.msra.mxu0 0.0
          %518 = vmatprep.subr.mxu0 0.0
          %519 = vmatpush1.msra.mxu0 0.0
          %520 = vmatprep.subr.mxu0 0.0
          %521 = vmatpush1.msra.mxu0 0.0
          %522 = vmatprep.subr.mxu0 0.0
          %523 = vmatpush1.msra.mxu0 0.0
          %524 = vmatprep.subr.mxu0 0.0
          %525 = vmatpush1.msra.mxu0 0.0
          %526 = vmatprep.subr.mxu0 0.0
          %527 = vmatpush1.msra.mxu0 %v490
          %528 = vmatprep.subr.mxu0 0.0
          %529 = vmatpush1.msra.mxu0 %v489
          %530 = vmatprep.subr.mxu0 0.0
          %531 = vmatpush1.msra.mxu0 %v488
          %532 = vmatprep.subr.mxu0 0.0
          %533 = vmatpush1.msra.mxu0 %v487
          %534 = vmatprep.subr.mxu0 0.0
          %535 = vmatpush2.msra.mxu0 0.0
          %536 = vmatprep.subr.mxu0 0.0
          %537 = vmatpush2.msra.mxu0 0.0
          %538 = vmatprep.subr.mxu0 0.0
          %539 = vmatpush2.msra.mxu0 0.0
          %540 = vmatprep.subr.mxu0 0.0
          %541 = vmatpush2.msra.mxu0 0.0
          %542 = vmatprep.subr.mxu0 0.0
          %543 = vmatpush2.msra.mxu0 0.0
          %544 = vmatprep.subr.mxu0 0.0
          %545 = vmatpush2.msra.mxu0 0.0
          %546 = vmatprep.subr.mxu0 0.0
          %547 = vmatpush2.msra.mxu0 0.0
          %548 = vmatprep.subr.mxu0 0.0
          %549 = vmatpush2.msra.mxu0 0.0
          %550 = vmatprep.subr.mxu0 0.0
          %551 = vmatpush2.msra.mxu0 0.0
          %552 = vmatprep.subr.mxu0 0.0
          %553 = vmatpush2.msra.mxu0 0.0
          %554 = vmatprep.subr.mxu0 0.0
          %555 = vmatpush2.msra.mxu0 0.0
          %556 = vmatprep.subr.mxu0 0.0
          %557 = vmatpush2.msra.mxu0 0.0
          %558 = vmatprep.subr.mxu0 0.0
          %559 = vmatpush2.msra.mxu0 0.0
          %560 = vmatprep.subr.mxu0 0.0
          %561 = vmatpush2.msra.mxu0 0.0
          %562 = vmatprep.subr.mxu0 0.0
          %563 = vmatpush2.msra.mxu0 0.0
          %564 = vmatprep.subr.mxu0 0.0
          %565 = vmatpush2.msra.mxu0 0.0
          %566 = vmatprep.mubr.f32.mxu0 0.0
          %567 = vmatmul.mubr.f32.gmra.mxu0 %v500
          %v568 = vpop.f32.mrf.mxu0
          %v569 = vadd.f32 %v496, %v568
          %v570 = vpop.f32.mrf.mxu0
          %571 = vdwg.mxu0
          %572 = vst.msk [vmem:[#allocation2] sm:$0xff] %vm498, %v569
          %v573 = vld [vmem:[%s478] sm:$0xff]
          %v574 = vld [vmem:[%s8] sm:$0xff]
          %v575 = vld [vmem:[%s8 + $0x8] sm:$0xff]
          %v576 = vld [vmem:[%s8 + $0x10] sm:$0xff]
          %v577 = vld [vmem:[%s8 + $0x18] sm:$0xff]
          %v578 = vld [vmem:[%s9] sm:$0x1]
          %v580 = vlaneseq
          %v581 = vshrl.u32 %v580, 7
          %v582 = vsub.s32 0, %v581
          %v583 = vrot.slane %v578, %v582
          %v586 = vsel %vm498, %v573, 0
          %588 = vmatprep.subr.mxu0 0.0
          %589 = vmatpush1.msra.mxu0 0.0
          %590 = vmatprep.subr.mxu0 0.0
          %591 = vmatpush1.msra.mxu0 0.0
          %592 = vmatprep.subr.mxu0 0.0
          %593 = vmatpush1.msra.mxu0 0.0
          %594 = vmatprep.subr.mxu0 0.0
          %595 = vmatpush1.msra.mxu0 0.0
          %596 = vmatprep.subr.mxu0 0.0
          %597 = vmatpush1.msra.mxu0 0.0
          %598 = vmatprep.subr.mxu0 0.0
          %599 = vmatpush1.msra.mxu0 0.0
          %600 = vmatprep.subr.mxu0 0.0
          %601 = vmatpush1.msra.mxu0 0.0
          %602 = vmatprep.subr.mxu0 0.0
          %603 = vmatpush1.msra.mxu0 0.0
          %604 = vmatprep.subr.mxu0 0.0
          %605 = vmatpush1.msra.mxu0 0.0
          %606 = vmatprep.subr.mxu0 0.0
          %607 = vmatpush1.msra.mxu0 0.0
          %608 = vmatprep.subr.mxu0 0.0
          %609 = vmatpush1.msra.mxu0 0.0
          %610 = vmatprep.subr.mxu0 0.0
          %611 = vmatpush1.msra.mxu0 0.0
          %612 = vmatprep.subr.mxu0 0.0
          %613 = vmatpush1.msra.mxu0 %v577
          %614 = vmatprep.subr.mxu0 0.0
          %615 = vmatpush1.msra.mxu0 %v576
          %616 = vmatprep.subr.mxu0 0.0
          %617 = vmatpush1.msra.mxu0 %v575
          %618 = vmatprep.subr.mxu0 0.0
          %619 = vmatpush1.msra.mxu0 %v574
          %620 = vmatprep.subr.mxu0 0.0
          %621 = vmatpush2.msra.mxu0 0.0
          %622 = vmatprep.subr.mxu0 0.0
          %623 = vmatpush2.msra.mxu0 0.0
          %624 = vmatprep.subr.mxu0 0.0
          %625 = vmatpush2.msra.mxu0 0.0
          %626 = vmatprep.subr.mxu0 0.0
          %627 = vmatpush2.msra.mxu0 0.0
          %628 = vmatprep.subr.mxu0 0.0
          %629 = vmatpush2.msra.mxu0 0.0
          %630 = vmatprep.subr.mxu0 0.0
          %631 = vmatpush2.msra.mxu0 0.0
          %632 = vmatprep.subr.mxu0 0.0
          %633 = vmatpush2.msra.mxu0 0.0
          %634 = vmatprep.subr.mxu0 0.0
          %635 = vmatpush2.msra.mxu0 0.0
          %636 = vmatprep.subr.mxu0 0.0
          %637 = vmatpush2.msra.mxu0 0.0
          %638 = vmatprep.subr.mxu0 0.0
          %639 = vmatpush2.msra.mxu0 0.0
          %640 = vmatprep.subr.mxu0 0.0
          %641 = vmatpush2.msra.mxu0 0.0
          %642 = vmatprep.subr.mxu0 0.0
          %643 = vmatpush2.msra.mxu0 0.0
          %644 = vmatprep.subr.mxu0 0.0
          %645 = vmatpush2.msra.mxu0 0.0
          %646 = vmatprep.subr.mxu0 0.0
          %647 = vmatpush2.msra.mxu0 0.0
          %648 = vmatprep.subr.mxu0 0.0
          %649 = vmatpush2.msra.mxu0 0.0
          %650 = vmatprep.subr.mxu0 0.0
          %651 = vmatpush2.msra.mxu0 0.0
          %652 = vmatprep.mubr.f32.mxu0 0.0
          %653 = vmatmul.mubr.f32.gmra.mxu0 %v586
          %v654 = vpop.f32.mrf.mxu0
          %v655 = vadd.f32 %v583, %v654
          %v656 = vpop.f32.mrf.mxu0
          %657 = vdwg.mxu0
          %658 = vst.msk [vmem:[#allocation3] sm:$0xff] %vm498, %v655
        $region72: #{mha_forward.1} parent=67 // pred_fallthru
          _
        %v659 = vld [vmem:[%s470] sm:$0xff]
        %v660 = vld [vmem:[%s4] sm:$0xff]
        %v661 = vld [vmem:[%s4 + $0x8] sm:$0xff]
        %v662 = vld [vmem:[%s4 + $0x10] sm:$0xff]
        %v663 = vld [vmem:[%s4 + $0x18] sm:$0xff]
        %v664 = vld [vmem:[%s5] sm:$0x1]
        %v666 = vlaneseq
        %v667 = vshrl.u32 %v666, 7
        %v668 = vsub.s32 0, %v667
        %v669 = vrot.slane %v664, %v668
        %vm671 = vcmask 261120
        %v673 = vsel %vm671, %v659, 0
        %675 = vmatprep.subr.mxu0 0.0
        %676 = vmatpush1.msra.mxu0 0.0
        %677 = vmatprep.subr.mxu0 0.0
        %678 = vmatpush1.msra.mxu0 0.0
        %679 = vmatprep.subr.mxu0 0.0
        %680 = vmatpush1.msra.mxu0 0.0
        %681 = vmatprep.subr.mxu0 0.0
        %682 = vmatpush1.msra.mxu0 0.0
        %683 = vmatprep.subr.mxu0 0.0
        %684 = vmatpush1.msra.mxu0 0.0
        %685 = vmatprep.subr.mxu0 0.0
        %686 = vmatpush1.msra.mxu0 0.0
        %687 = vmatprep.subr.mxu0 0.0
        %688 = vmatpush1.msra.mxu0 0.0
        %689 = vmatprep.subr.mxu0 0.0
        %690 = vmatpush1.msra.mxu0 0.0
        %691 = vmatprep.subr.mxu0 0.0
        %692 = vmatpush1.msra.mxu0 0.0
        %693 = vmatprep.subr.mxu0 0.0
        %694 = vmatpush1.msra.mxu0 0.0
        %695 = vmatprep.subr.mxu0 0.0
        %696 = vmatpush1.msra.mxu0 0.0
        %697 = vmatprep.subr.mxu0 0.0
        %698 = vmatpush1.msra.mxu0 0.0
        %699 = vmatprep.subr.mxu0 0.0
        %700 = vmatpush1.msra.mxu0 %v663
        %701 = vmatprep.subr.mxu0 0.0
        %702 = vmatpush1.msra.mxu0 %v662
        %703 = vmatprep.subr.mxu0 0.0
        %704 = vmatpush1.msra.mxu0 %v661
        %705 = vmatprep.subr.mxu0 0.0
        %706 = vmatpush1.msra.mxu0 %v660
        %707 = vmatprep.subr.mxu0 0.0
        %708 = vmatpush2.msra.mxu0 0.0
        %709 = vmatprep.subr.mxu0 0.0
        %710 = vmatpush2.msra.mxu0 0.0
        %711 = vmatprep.subr.mxu0 0.0
        %712 = vmatpush2.msra.mxu0 0.0
        %713 = vmatprep.subr.mxu0 0.0
        %714 = vmatpush2.msra.mxu0 0.0
        %715 = vmatprep.subr.mxu0 0.0
        %716 = vmatpush2.msra.mxu0 0.0
        %717 = vmatprep.subr.mxu0 0.0
        %718 = vmatpush2.msra.mxu0 0.0
        %719 = vmatprep.subr.mxu0 0.0
        %720 = vmatpush2.msra.mxu0 0.0
        %721 = vmatprep.subr.mxu0 0.0
        %722 = vmatpush2.msra.mxu0 0.0
        %723 = vmatprep.subr.mxu0 0.0
        %724 = vmatpush2.msra.mxu0 0.0
        %725 = vmatprep.subr.mxu0 0.0
        %726 = vmatpush2.msra.mxu0 0.0
        %727 = vmatprep.subr.mxu0 0.0
        %728 = vmatpush2.msra.mxu0 0.0
        %729 = vmatprep.subr.mxu0 0.0
        %730 = vmatpush2.msra.mxu0 0.0
        %731 = vmatprep.subr.mxu0 0.0
        %732 = vmatpush2.msra.mxu0 0.0
        %733 = vmatprep.subr.mxu0 0.0
        %734 = vmatpush2.msra.mxu0 0.0
        %735 = vmatprep.subr.mxu0 0.0
        %736 = vmatpush2.msra.mxu0 0.0
        %737 = vmatprep.subr.mxu0 0.0
        %738 = vmatpush2.msra.mxu0 0.0
        %739 = vmatprep.mubr.f32.mxu0 0.0
        %740 = vmatmul.mubr.f32.gmra.mxu0 %v673
        %v741 = vpop.f32.mrf.mxu0
        %v742 = vadd.f32 %v669, %v741
        %v743 = vpop.f32.mrf.mxu0
        %744 = vdwg.mxu0
        %v745 = vmul.f32 %v742, 0.35355338
        %v746 = vld [vmem:[#allocation2] sm:$0xff]
        %v747 = vld [vmem:[#allocation3] sm:$0xff]
        %v748 = vld [vmem:[%s481] sm:$0x1]
        %vm749 = vcmp.ne.s32.totalorder %v748, 0
        %vm750 = vcmask 64512
        %v752 = vsel %vm750, %v745, 0
        %v755 = vsel %vm750, %v746, 0
        %757 = vmatprep.subr.mxu0 0.0
        %758 = vmatpush1.xpose.msra.mxu0 0.0
        %759 = vmatprep.subr.mxu0 0.0
        %760 = vmatpush1.xpose.msra.mxu0 0.0
        %761 = vmatprep.subr.mxu0 0.0
        %762 = vmatpush1.xpose.msra.mxu0 0.0
        %763 = vmatprep.subr.mxu0 0.0
        %764 = vmatpush1.xpose.msra.mxu0 0.0
        %765 = vmatprep.subr.mxu0 0.0
        %766 = vmatpush1.xpose.msra.mxu0 0.0
        %767 = vmatprep.subr.mxu0 0.0
        %768 = vmatpush1.xpose.msra.mxu0 0.0
        %769 = vmatprep.subr.mxu0 0.0
        %770 = vmatpush1.xpose.msra.mxu0 0.0
        %771 = vmatprep.subr.mxu0 0.0
        %772 = vmatpush1.xpose.msra.mxu0 0.0
        %773 = vmatprep.subr.mxu0 0.0
        %774 = vmatpush1.xpose.msra.mxu0 0.0
        %775 = vmatprep.subr.mxu0 0.0
        %776 = vmatpush1.xpose.msra.mxu0 0.0
        %777 = vmatprep.subr.mxu0 0.0
        %778 = vmatpush1.xpose.msra.mxu0 0.0
        %779 = vmatprep.subr.mxu0 0.0
        %780 = vmatpush1.xpose.msra.mxu0 0.0
        %781 = vmatprep.subr.mxu0 0.0
        %782 = vmatpush1.xpose.msra.mxu0 0.0
        %783 = vmatprep.subr.mxu0 0.0
        %784 = vmatpush1.xpose.msra.mxu0 0.0
        %785 = vmatprep.subr.mxu0 0.0
        %786 = vmatpush1.xpose.msra.mxu0 0.0
        %787 = vmatprep.subr.mxu0 0.0
        %788 = vmatpush1.xpose.msra.mxu0 %v755
        %789 = vmatprep.subr.mxu0 0.0
        %790 = vmatpush2.xpose.msra.mxu0 0.0
        %791 = vmatprep.subr.mxu0 0.0
        %792 = vmatpush2.xpose.msra.mxu0 0.0
        %793 = vmatprep.subr.mxu0 0.0
        %794 = vmatpush2.xpose.msra.mxu0 0.0
        %795 = vmatprep.subr.mxu0 0.0
        %796 = vmatpush2.xpose.msra.mxu0 0.0
        %797 = vmatprep.subr.mxu0 0.0
        %798 = vmatpush2.xpose.msra.mxu0 0.0
        %799 = vmatprep.subr.mxu0 0.0
        %800 = vmatpush2.xpose.msra.mxu0 0.0
        %801 = vmatprep.subr.mxu0 0.0
        %802 = vmatpush2.xpose.msra.mxu0 0.0
        %803 = vmatprep.subr.mxu0 0.0
        %804 = vmatpush2.xpose.msra.mxu0 0.0
        %805 = vmatprep.subr.mxu0 0.0
        %806 = vmatpush2.xpose.msra.mxu0 0.0
        %807 = vmatprep.subr.mxu0 0.0
        %808 = vmatpush2.xpose.msra.mxu0 0.0
        %809 = vmatprep.subr.mxu0 0.0
        %810 = vmatpush2.xpose.msra.mxu0 0.0
        %811 = vmatprep.subr.mxu0 0.0
        %812 = vmatpush2.xpose.msra.mxu0 0.0
        %813 = vmatprep.subr.mxu0 0.0
        %814 = vmatpush2.xpose.msra.mxu0 0.0
        %815 = vmatprep.subr.mxu0 0.0
        %816 = vmatpush2.xpose.msra.mxu0 0.0
        %817 = vmatprep.subr.mxu0 0.0
        %818 = vmatpush2.xpose.msra.mxu0 0.0
        %819 = vmatprep.subr.mxu0 0.0
        %820 = vmatpush2.xpose.msra.mxu0 0.0
        %821 = vmatprep.mubr.f32.mxu0 0.0
        %822 = vmatmul.mubr.f32.gmra.mxu0 %v752
        %v823 = vpop.f32.mrf.mxu0
        %v824 = vadd.f32 0.0, %v823
        %v825 = vpop.f32.mrf.mxu0
        %826 = vdwg.mxu0
        %v827 = vsel %vm749, 1, 0
        %v828 = vlaneseq
        %v829 = vshrl.u32 %v828, 7
        %v830 = vsub.s32 0, %v829
        %v831 = vrot.slane %v827, %v830
        %vm832 = vcmp.eq.s32.totalorder %v831, 1
        %v833 = vsel %vm832, %v824, -1e+30
        %v834 = vsel %vm750, %v833, -inf
        %835 = vmax.xlane.f32.xlu0 %v834
        %v836 = vpop.xlane.xlu0 %835
        %v837 = vsub.f32 %v833, %v836
        %v838 = vmul.f32 %v837, 1.442695
        %v839 = vpow.pop %v838
        %v840 = vsel %vm750, %v839, 0.0
        %841 = vadd.xlane.f32.xlu0 %v840
        %v842 = vpop.xlane.xlu0 %841
        %v843 = vrcp.pop %v842
        %v844 = vmul.f32 %v839, %v843
        %v846 = vsel %vm750, %v844, 0
        %848 = vmatprep.subr.mxu0 0.0
        %849 = vmatpush1.msra.mxu0 0.0
        %850 = vmatprep.subr.mxu0 0.0
        %851 = vmatpush1.msra.mxu0 0.0
        %852 = vmatprep.subr.mxu0 0.0
        %853 = vmatpush1.msra.mxu0 0.0
        %854 = vmatprep.subr.mxu0 0.0
        %855 = vmatpush1.msra.mxu0 0.0
        %856 = vmatprep.subr.mxu0 0.0
        %857 = vmatpush1.msra.mxu0 0.0
        %858 = vmatprep.subr.mxu0 0.0
        %859 = vmatpush1.msra.mxu0 0.0
        %860 = vmatprep.subr.mxu0 0.0
        %861 = vmatpush1.msra.mxu0 0.0
        %862 = vmatprep.subr.mxu0 0.0
        %863 = vmatpush1.msra.mxu0 0.0
        %864 = vmatprep.subr.mxu0 0.0
        %865 = vmatpush1.msra.mxu0 0.0
        %866 = vmatprep.subr.mxu0 0.0
        %867 = vmatpush1.msra.mxu0 0.0
        %868 = vmatprep.subr.mxu0 0.0
        %869 = vmatpush1.msra.mxu0 0.0
        %870 = vmatprep.subr.mxu0 0.0
        %871 = vmatpush1.msra.mxu0 0.0
        %872 = vmatprep.subr.mxu0 0.0
        %873 = vmatpush1.msra.mxu0 0.0
        %874 = vmatprep.subr.mxu0 0.0
        %875 = vmatpush1.msra.mxu0 0.0
        %876 = vmatprep.subr.mxu0 0.0
        %877 = vmatpush1.msra.mxu0 0.0
        %878 = vmatprep.subr.mxu0 0.0
        %879 = vmatpush1.msra.mxu0 %v747
        %880 = vmatprep.subr.mxu0 0.0
        %881 = vmatpush2.msra.mxu0 0.0
        %882 = vmatprep.subr.mxu0 0.0
        %883 = vmatpush2.msra.mxu0 0.0
        %884 = vmatprep.subr.mxu0 0.0
        %885 = vmatpush2.msra.mxu0 0.0
        %886 = vmatprep.subr.mxu0 0.0
        %887 = vmatpush2.msra.mxu0 0.0
        %888 = vmatprep.subr.mxu0 0.0
        %889 = vmatpush2.msra.mxu0 0.0
        %890 = vmatprep.subr.mxu0 0.0
        %891 = vmatpush2.msra.mxu0 0.0
        %892 = vmatprep.subr.mxu0 0.0
        %893 = vmatpush2.msra.mxu0 0.0
        %894 = vmatprep.subr.mxu0 0.0
        %895 = vmatpush2.msra.mxu0 0.0
        %896 = vmatprep.subr.mxu0 0.0
        %897 = vmatpush2.msra.mxu0 0.0
        %898 = vmatprep.subr.mxu0 0.0
        %899 = vmatpush2.msra.mxu0 0.0
        %900 = vmatprep.subr.mxu0 0.0
        %901 = vmatpush2.msra.mxu0 0.0
        %902 = vmatprep.subr.mxu0 0.0
        %903 = vmatpush2.msra.mxu0 0.0
        %904 = vmatprep.subr.mxu0 0.0
        %905 = vmatpush2.msra.mxu0 0.0
        %906 = vmatprep.subr.mxu0 0.0
        %907 = vmatpush2.msra.mxu0 0.0
        %908 = vmatprep.subr.mxu0 0.0
        %909 = vmatpush2.msra.mxu0 0.0
        %910 = vmatprep.subr.mxu0 0.0
        %911 = vmatpush2.msra.mxu0 0.0
        %912 = vmatprep.mubr.f32.mxu0 0.0
        %913 = vmatmul.mubr.f32.gmra.mxu0 %v846
        %v914 = vpop.f32.mrf.mxu0
        %v915 = vadd.f32 0.0, %v914
        %v916 = vpop.f32.mrf.mxu0
        %917 = vdwg.mxu0
        %918 = vst.msk [vmem:[#allocation4] sm:$0xff] %vm750, %v915
        %919 = vrot.lane.b32.xlu0 %v745, 120
        %v920 = vpop.permute.xlu0 %919
        %921 = vrot.lane.b32.xlu0 %v746, 120
        %v922 = vpop.permute.xlu0 %921
        %v923 = vsel %vm750, %v920, 0
        %v925 = vsel %vm750, %v922, 0
        %927 = vmatprep.subr.mxu0 0.0
        %928 = vmatpush1.xpose.msra.mxu0 0.0
        %929 = vmatprep.subr.mxu0 0.0
        %930 = vmatpush1.xpose.msra.mxu0 0.0
        %931 = vmatprep.subr.mxu0 0.0
        %932 = vmatpush1.xpose.msra.mxu0 0.0
        %933 = vmatprep.subr.mxu0 0.0
        %934 = vmatpush1.xpose.msra.mxu0 0.0
        %935 = vmatprep.subr.mxu0 0.0
        %936 = vmatpush1.xpose.msra.mxu0 0.0
        %937 = vmatprep.subr.mxu0 0.0
        %938 = vmatpush1.xpose.msra.mxu0 0.0
        %939 = vmatprep.subr.mxu0 0.0
        %940 = vmatpush1.xpose.msra.mxu0 0.0
        %941 = vmatprep.subr.mxu0 0.0
        %942 = vmatpush1.xpose.msra.mxu0 0.0
        %943 = vmatprep.subr.mxu0 0.0
        %944 = vmatpush1.xpose.msra.mxu0 0.0
        %945 = vmatprep.subr.mxu0 0.0
        %946 = vmatpush1.xpose.msra.mxu0 0.0
        %947 = vmatprep.subr.mxu0 0.0
        %948 = vmatpush1.xpose.msra.mxu0 0.0
        %949 = vmatprep.subr.mxu0 0.0
        %950 = vmatpush1.xpose.msra.mxu0 0.0
        %951 = vmatprep.subr.mxu0 0.0
        %952 = vmatpush1.xpose.msra.mxu0 0.0
        %953 = vmatprep.subr.mxu0 0.0
        %954 = vmatpush1.xpose.msra.mxu0 0.0
        %955 = vmatprep.subr.mxu0 0.0
        %956 = vmatpush1.xpose.msra.mxu0 0.0
        %957 = vmatprep.subr.mxu0 0.0
        %958 = vmatpush1.xpose.msra.mxu0 %v925
        %959 = vmatprep.subr.mxu0 0.0
        %960 = vmatpush2.xpose.msra.mxu0 0.0
        %961 = vmatprep.subr.mxu0 0.0
        %962 = vmatpush2.xpose.msra.mxu0 0.0
        %963 = vmatprep.subr.mxu0 0.0
        %964 = vmatpush2.xpose.msra.mxu0 0.0
        %965 = vmatprep.subr.mxu0 0.0
        %966 = vmatpush2.xpose.msra.mxu0 0.0
        %967 = vmatprep.subr.mxu0 0.0
        %968 = vmatpush2.xpose.msra.mxu0 0.0
        %969 = vmatprep.subr.mxu0 0.0
        %970 = vmatpush2.xpose.msra.mxu0 0.0
        %971 = vmatprep.subr.mxu0 0.0
        %972 = vmatpush2.xpose.msra.mxu0 0.0
        %973 = vmatprep.subr.mxu0 0.0
        %974 = vmatpush2.xpose.msra.mxu0 0.0
        %975 = vmatprep.subr.mxu0 0.0
        %976 = vmatpush2.xpose.msra.mxu0 0.0
        %977 = vmatprep.subr.mxu0 0.0
        %978 = vmatpush2.xpose.msra.mxu0 0.0
        %979 = vmatprep.subr.mxu0 0.0
        %980 = vmatpush2.xpose.msra.mxu0 0.0
        %981 = vmatprep.subr.mxu0 0.0
        %982 = vmatpush2.xpose.msra.mxu0 0.0
        %983 = vmatprep.subr.mxu0 0.0
        %984 = vmatpush2.xpose.msra.mxu0 0.0
        %985 = vmatprep.subr.mxu0 0.0
        %986 = vmatpush2.xpose.msra.mxu0 0.0
        %987 = vmatprep.subr.mxu0 0.0
        %988 = vmatpush2.xpose.msra.mxu0 0.0
        %989 = vmatprep.subr.mxu0 0.0
        %990 = vmatpush2.xpose.msra.mxu0 0.0
        %991 = vmatprep.mubr.f32.mxu0 0.0
        %992 = vmatmul.mubr.f32.gmra.mxu0 %v923
        %v993 = vpop.f32.mrf.mxu0
        %v994 = vadd.f32 0.0, %v993
        %v995 = vpop.f32.mrf.mxu0
        %996 = vdwg.mxu0
        %v997 = vsel %vm832, %v994, -1e+30
        %v998 = vsel %vm750, %v997, -inf
        %999 = vmax.xlane.f32.xlu0 %v998
        %v1000 = vpop.xlane.xlu0 %999
        %v1001 = vsub.f32 %v997, %v1000
        %v1002 = vmul.f32 %v1001, 1.442695
        %v1003 = vpow.pop %v1002
        %v1004 = vsel %vm750, %v1003, 0.0
        %1005 = vadd.xlane.f32.xlu0 %v1004
        %v1006 = vpop.xlane.xlu0 %1005
        %v1007 = vrcp.pop %v1006
        %v1008 = vmul.f32 %v1003, %v1007
        %1010 = vrot.lane.b32.xlu0 %v747, 120
        %v1011 = vpop.permute.xlu0 %1010
        %v1014 = vsel %vm750, %v1008, 0
        %1016 = vmatprep.subr.mxu0 0.0
        %1017 = vmatpush1.msra.mxu0 0.0
        %1018 = vmatprep.subr.mxu0 0.0
        %1019 = vmatpush1.msra.mxu0 0.0
        %1020 = vmatprep.subr.mxu0 0.0
        %1021 = vmatpush1.msra.mxu0 0.0
        %1022 = vmatprep.subr.mxu0 0.0
        %1023 = vmatpush1.msra.mxu0 0.0
        %1024 = vmatprep.subr.mxu0 0.0
        %1025 = vmatpush1.msra.mxu0 0.0
        %1026 = vmatprep.subr.mxu0 0.0
        %1027 = vmatpush1.msra.mxu0 0.0
        %1028 = vmatprep.subr.mxu0 0.0
        %1029 = vmatpush1.msra.mxu0 0.0
        %1030 = vmatprep.subr.mxu0 0.0
        %1031 = vmatpush1.msra.mxu0 0.0
        %1032 = vmatprep.subr.mxu0 0.0
        %1033 = vmatpush1.msra.mxu0 0.0
        %1034 = vmatprep.subr.mxu0 0.0
        %1035 = vmatpush1.msra.mxu0 0.0
        %1036 = vmatprep.subr.mxu0 0.0
        %1037 = vmatpush1.msra.mxu0 0.0
        %1038 = vmatprep.subr.mxu0 0.0
        %1039 = vmatpush1.msra.mxu0 0.0
        %1040 = vmatprep.subr.mxu0 0.0
        %1041 = vmatpush1.msra.mxu0 0.0
        %1042 = vmatprep.subr.mxu0 0.0
        %1043 = vmatpush1.msra.mxu0 0.0
        %1044 = vmatprep.subr.mxu0 0.0
        %1045 = vmatpush1.msra.mxu0 0.0
        %1046 = vmatprep.subr.mxu0 0.0
        %1047 = vmatpush1.msra.mxu0 %v1011
        %1048 = vmatprep.subr.mxu0 0.0
        %1049 = vmatpush2.msra.mxu0 0.0
        %1050 = vmatprep.subr.mxu0 0.0
        %1051 = vmatpush2.msra.mxu0 0.0
        %1052 = vmatprep.subr.mxu0 0.0
        %1053 = vmatpush2.msra.mxu0 0.0
        %1054 = vmatprep.subr.mxu0 0.0
        %1055 = vmatpush2.msra.mxu0 0.0
        %1056 = vmatprep.subr.mxu0 0.0
        %1057 = vmatpush2.msra.mxu0 0.0
        %1058 = vmatprep.subr.mxu0 0.0
        %1059 = vmatpush2.msra.mxu0 0.0
        %1060 = vmatprep.subr.mxu0 0.0
        %1061 = vmatpush2.msra.mxu0 0.0
        %1062 = vmatprep.subr.mxu0 0.0
        %1063 = vmatpush2.msra.mxu0 0.0
        %1064 = vmatprep.subr.mxu0 0.0
        %1065 = vmatpush2.msra.mxu0 0.0
        %1066 = vmatprep.subr.mxu0 0.0
        %1067 = vmatpush2.msra.mxu0 0.0
        %1068 = vmatprep.subr.mxu0 0.0
        %1069 = vmatpush2.msra.mxu0 0.0
        %1070 = vmatprep.subr.mxu0 0.0
        %1071 = vmatpush2.msra.mxu0 0.0
        %1072 = vmatprep.subr.mxu0 0.0
        %1073 = vmatpush2.msra.mxu0 0.0
        %1074 = vmatprep.subr.mxu0 0.0
        %1075 = vmatpush2.msra.mxu0 0.0
        %1076 = vmatprep.subr.mxu0 0.0
        %1077 = vmatpush2.msra.mxu0 0.0
        %1078 = vmatprep.subr.mxu0 0.0
        %1079 = vmatpush2.msra.mxu0 0.0
        %1080 = vmatprep.mubr.f32.mxu0 0.0
        %1081 = vmatmul.mubr.f32.gmra.mxu0 %v1014
        %v1082 = vpop.f32.mrf.mxu0
        %v1083 = vadd.f32 0.0, %v1082
        %v1084 = vpop.f32.mrf.mxu0
        %1085 = vdwg.mxu0
        %1087 = vrot.lane.b32.xlu0 %v1083, 8
        %v1088 = vpop.permute.xlu0 %1087
        %vm1090 = vcmask 130112
        %1091 = vst.msk [vmem:[#allocation4] sm:$0xff] %vm1090, %v1088
        %1092 = vrot.lane.b32.xlu0 %v745, 112
        %v1093 = vpop.permute.xlu0 %1092
        %1094 = vrot.lane.b32.xlu0 %v746, 112
        %v1095 = vpop.permute.xlu0 %1094
        %v1096 = vsel %vm750, %v1093, 0
        %v1098 = vsel %vm750, %v1095, 0
        %1100 = vmatprep.subr.mxu0 0.0
        %1101 = vmatpush1.xpose.msra.mxu0 0.0
        %1102 = vmatprep.subr.mxu0 0.0
        %1103 = vmatpush1.xpose.msra.mxu0 0.0
        %1104 = vmatprep.subr.mxu0 0.0
        %1105 = vmatpush1.xpose.msra.mxu0 0.0
        %1106 = vmatprep.subr.mxu0 0.0
        %1107 = vmatpush1.xpose.msra.mxu0 0.0
        %1108 = vmatprep.subr.mxu0 0.0
        %1109 = vmatpush1.xpose.msra.mxu0 0.0
        %1110 = vmatprep.subr.mxu0 0.0
        %1111 = vmatpush1.xpose.msra.mxu0 0.0
        %1112 = vmatprep.subr.mxu0 0.0
        %1113 = vmatpush1.xpose.msra.mxu0 0.0
        %1114 = vmatprep.subr.mxu0 0.0
        %1115 = vmatpush1.xpose.msra.mxu0 0.0
        %1116 = vmatprep.subr.mxu0 0.0
        %1117 = vmatpush1.xpose.msra.mxu0 0.0
        %1118 = vmatprep.subr.mxu0 0.0
        %1119 = vmatpush1.xpose.msra.mxu0 0.0
        %1120 = vmatprep.subr.mxu0 0.0
        %1121 = vmatpush1.xpose.msra.mxu0 0.0
        %1122 = vmatprep.subr.mxu0 0.0
        %1123 = vmatpush1.xpose.msra.mxu0 0.0
        %1124 = vmatprep.subr.mxu0 0.0
        %1125 = vmatpush1.xpose.msra.mxu0 0.0
        %1126 = vmatprep.subr.mxu0 0.0
        %1127 = vmatpush1.xpose.msra.mxu0 0.0
        %1128 = vmatprep.subr.mxu0 0.0
        %1129 = vmatpush1.xpose.msra.mxu0 0.0
        %1130 = vmatprep.subr.mxu0 0.0
        %1131 = vmatpush1.xpose.msra.mxu0 %v1098
        %1132 = vmatprep.subr.mxu0 0.0
        %1133 = vmatpush2.xpose.msra.mxu0 0.0
        %1134 = vmatprep.subr.mxu0 0.0
        %1135 = vmatpush2.xpose.msra.mxu0 0.0
        %1136 = vmatprep.subr.mxu0 0.0
        %1137 = vmatpush2.xpose.msra.mxu0 0.0
        %1138 = vmatprep.subr.mxu0 0.0
        %1139 = vmatpush2.xpose.msra.mxu0 0.0
        %1140 = vmatprep.subr.mxu0 0.0
        %1141 = vmatpush2.xpose.msra.mxu0 0.0
        %1142 = vmatprep.subr.mxu0 0.0
        %1143 = vmatpush2.xpose.msra.mxu0 0.0
        %1144 = vmatprep.subr.mxu0 0.0
        %1145 = vmatpush2.xpose.msra.mxu0 0.0
        %1146 = vmatprep.subr.mxu0 0.0
        %1147 = vmatpush2.xpose.msra.mxu0 0.0
        %1148 = vmatprep.subr.mxu0 0.0
        %1149 = vmatpush2.xpose.msra.mxu0 0.0
        %1150 = vmatprep.subr.mxu0 0.0
        %1151 = vmatpush2.xpose.msra.mxu0 0.0
        %1152 = vmatprep.subr.mxu0 0.0
        %1153 = vmatpush2.xpose.msra.mxu0 0.0
        %1154 = vmatprep.subr.mxu0 0.0
        %1155 = vmatpush2.xpose.msra.mxu0 0.0
        %1156 = vmatprep.subr.mxu0 0.0
        %1157 = vmatpush2.xpose.msra.mxu0 0.0
        %1158 = vmatprep.subr.mxu0 0.0
        %1159 = vmatpush2.xpose.msra.mxu0 0.0
        %1160 = vmatprep.subr.mxu0 0.0
        %1161 = vmatpush2.xpose.msra.mxu0 0.0
        %1162 = vmatprep.subr.mxu0 0.0
        %1163 = vmatpush2.xpose.msra.mxu0 0.0
        %1164 = vmatprep.mubr.f32.mxu0 0.0
        %1165 = vmatmul.mubr.f32.gmra.mxu0 %v1096
        %v1166 = vpop.f32.mrf.mxu0
        %v1167 = vadd.f32 0.0, %v1166
        %v1168 = vpop.f32.mrf.mxu0
        %1169 = vdwg.mxu0
        %v1170 = vsel %vm832, %v1167, -1e+30
        %v1171 = vsel %vm750, %v1170, -inf
        %1172 = vmax.xlane.f32.xlu0 %v1171
        %v1173 = vpop.xlane.xlu0 %1172
        %v1174 = vsub.f32 %v1170, %v1173
        %v1175 = vmul.f32 %v1174, 1.442695
        %v1176 = vpow.pop %v1175
        %v1177 = vsel %vm750, %v1176, 0.0
        %1178 = vadd.xlane.f32.xlu0 %v1177
        %v1179 = vpop.xlane.xlu0 %1178
        %v1180 = vrcp.pop %v1179
        %v1181 = vmul.f32 %v1176, %v1180
        %1182 = vrot.lane.b32.xlu0 %v747, 112
        %v1183 = vpop.permute.xlu0 %1182
        %v1186 = vsel %vm750, %v1181, 0
        %1188 = vmatprep.subr.mxu0 0.0
        %1189 = vmatpush1.msra.mxu0 0.0
        %1190 = vmatprep.subr.mxu0 0.0
        %1191 = vmatpush1.msra.mxu0 0.0
        %1192 = vmatprep.subr.mxu0 0.0
        %1193 = vmatpush1.msra.mxu0 0.0
        %1194 = vmatprep.subr.mxu0 0.0
        %1195 = vmatpush1.msra.mxu0 0.0
        %1196 = vmatprep.subr.mxu0 0.0
        %1197 = vmatpush1.msra.mxu0 0.0
        %1198 = vmatprep.subr.mxu0 0.0
        %1199 = vmatpush1.msra.mxu0 0.0
        %1200 = vmatprep.subr.mxu0 0.0
        %1201 = vmatpush1.msra.mxu0 0.0
        %1202 = vmatprep.subr.mxu0 0.0
        %1203 = vmatpush1.msra.mxu0 0.0
        %1204 = vmatprep.subr.mxu0 0.0
        %1205 = vmatpush1.msra.mxu0 0.0
        %1206 = vmatprep.subr.mxu0 0.0
        %1207 = vmatpush1.msra.mxu0 0.0
        %1208 = vmatprep.subr.mxu0 0.0
        %1209 = vmatpush1.msra.mxu0 0.0
        %1210 = vmatprep.subr.mxu0 0.0
        %1211 = vmatpush1.msra.mxu0 0.0
        %1212 = vmatprep.subr.mxu0 0.0
        %1213 = vmatpush1.msra.mxu0 0.0
        %1214 = vmatprep.subr.mxu0 0.0
        %1215 = vmatpush1.msra.mxu0 0.0
        %1216 = vmatprep.subr.mxu0 0.0
        %1217 = vmatpush1.msra.mxu0 0.0
        %1218 = vmatprep.subr.mxu0 0.0
        %1219 = vmatpush1.msra.mxu0 %v1183
        %1220 = vmatprep.subr.mxu0 0.0
        %1221 = vmatpush2.msra.mxu0 0.0
        %1222 = vmatprep.subr.mxu0 0.0
        %1223 = vmatpush2.msra.mxu0 0.0
        %1224 = vmatprep.subr.mxu0 0.0
        %1225 = vmatpush2.msra.mxu0 0.0
        %1226 = vmatprep.subr.mxu0 0.0
        %1227 = vmatpush2.msra.mxu0 0.0
        %1228 = vmatprep.subr.mxu0 0.0
        %1229 = vmatpush2.msra.mxu0 0.0
        %1230 = vmatprep.subr.mxu0 0.0
        %1231 = vmatpush2.msra.mxu0 0.0
        %1232 = vmatprep.subr.mxu0 0.0
        %1233 = vmatpush2.msra.mxu0 0.0
        %1234 = vmatprep.subr.mxu0 0.0
        %1235 = vmatpush2.msra.mxu0 0.0
        %1236 = vmatprep.subr.mxu0 0.0
        %1237 = vmatpush2.msra.mxu0 0.0
        %1238 = vmatprep.subr.mxu0 0.0
        %1239 = vmatpush2.msra.mxu0 0.0
        %1240 = vmatprep.subr.mxu0 0.0
        %1241 = vmatpush2.msra.mxu0 0.0
        %1242 = vmatprep.subr.mxu0 0.0
        %1243 = vmatpush2.msra.mxu0 0.0
        %1244 = vmatprep.subr.mxu0 0.0
        %1245 = vmatpush2.msra.mxu0 0.0
        %1246 = vmatprep.subr.mxu0 0.0
        %1247 = vmatpush2.msra.mxu0 0.0
        %1248 = vmatprep.subr.mxu0 0.0
        %1249 = vmatpush2.msra.mxu0 0.0
        %1250 = vmatprep.subr.mxu0 0.0
        %1251 = vmatpush2.msra.mxu0 0.0
        %1252 = vmatprep.mubr.f32.mxu0 0.0
        %1253 = vmatmul.mubr.f32.gmra.mxu0 %v1186
        %v1254 = vpop.f32.mrf.mxu0
        %v1255 = vadd.f32 0.0, %v1254
        %v1256 = vpop.f32.mrf.mxu0
        %1257 = vdwg.mxu0
        %1259 = vrot.lane.b32.xlu0 %v1255, 16
        %v1260 = vpop.permute.xlu0 %1259
        %vm1262 = vcmask 195712
        %1263 = vst.msk [vmem:[#allocation4] sm:$0xff] %vm1262, %v1260
        %1264 = vrot.lane.b32.xlu0 %v745, 104
        %v1265 = vpop.permute.xlu0 %1264
        %1266 = vrot.lane.b32.xlu0 %v746, 104
        %v1267 = vpop.permute.xlu0 %1266
        %v1268 = vsel %vm750, %v1265, 0
        %v1270 = vsel %vm750, %v1267, 0
        %1272 = vmatprep.subr.mxu0 0.0
        %1273 = vmatpush1.xpose.msra.mxu0 0.0
        %1274 = vmatprep.subr.mxu0 0.0
        %1275 = vmatpush1.xpose.msra.mxu0 0.0
        %1276 = vmatprep.subr.mxu0 0.0
        %1277 = vmatpush1.xpose.msra.mxu0 0.0
        %1278 = vmatprep.subr.mxu0 0.0
        %1279 = vmatpush1.xpose.msra.mxu0 0.0
        %1280 = vmatprep.subr.mxu0 0.0
        %1281 = vmatpush1.xpose.msra.mxu0 0.0
        %1282 = vmatprep.subr.mxu0 0.0
        %1283 = vmatpush1.xpose.msra.mxu0 0.0
        %1284 = vmatprep.subr.mxu0 0.0
        %1285 = vmatpush1.xpose.msra.mxu0 0.0
        %1286 = vmatprep.subr.mxu0 0.0
        %1287 = vmatpush1.xpose.msra.mxu0 0.0
        %1288 = vmatprep.subr.mxu0 0.0
        %1289 = vmatpush1.xpose.msra.mxu0 0.0
        %1290 = vmatprep.subr.mxu0 0.0
        %1291 = vmatpush1.xpose.msra.mxu0 0.0
        %1292 = vmatprep.subr.mxu0 0.0
        %1293 = vmatpush1.xpose.msra.mxu0 0.0
        %1294 = vmatprep.subr.mxu0 0.0
        %1295 = vmatpush1.xpose.msra.mxu0 0.0
        %1296 = vmatprep.subr.mxu0 0.0
        %1297 = vmatpush1.xpose.msra.mxu0 0.0
        %1298 = vmatprep.subr.mxu0 0.0
        %1299 = vmatpush1.xpose.msra.mxu0 0.0
        %1300 = vmatprep.subr.mxu0 0.0
        %1301 = vmatpush1.xpose.msra.mxu0 0.0
        %1302 = vmatprep.subr.mxu0 0.0
        %1303 = vmatpush1.xpose.msra.mxu0 %v1270
        %1304 = vmatprep.subr.mxu0 0.0
        %1305 = vmatpush2.xpose.msra.mxu0 0.0
        %1306 = vmatprep.subr.mxu0 0.0
        %1307 = vmatpush2.xpose.msra.mxu0 0.0
        %1308 = vmatprep.subr.mxu0 0.0
        %1309 = vmatpush2.xpose.msra.mxu0 0.0
        %1310 = vmatprep.subr.mxu0 0.0
        %1311 = vmatpush2.xpose.msra.mxu0 0.0
        %1312 = vmatprep.subr.mxu0 0.0
        %1313 = vmatpush2.xpose.msra.mxu0 0.0
        %1314 = vmatprep.subr.mxu0 0.0
        %1315 = vmatpush2.xpose.msra.mxu0 0.0
        %1316 = vmatprep.subr.mxu0 0.0
        %1317 = vmatpush2.xpose.msra.mxu0 0.0
        %1318 = vmatprep.subr.mxu0 0.0
        %1319 = vmatpush2.xpose.msra.mxu0 0.0
        %1320 = vmatprep.subr.mxu0 0.0
        %1321 = vmatpush2.xpose.msra.mxu0 0.0
        %1322 = vmatprep.subr.mxu0 0.0
        %1323 = vmatpush2.xpose.msra.mxu0 0.0
        %1324 = vmatprep.subr.mxu0 0.0
        %1325 = vmatpush2.xpose.msra.mxu0 0.0
        %1326 = vmatprep.subr.mxu0 0.0
        %1327 = vmatpush2.xpose.msra.mxu0 0.0
        %1328 = vmatprep.subr.mxu0 0.0
        %1329 = vmatpush2.xpose.msra.mxu0 0.0
        %1330 = vmatprep.subr.mxu0 0.0
        %1331 = vmatpush2.xpose.msra.mxu0 0.0
        %1332 = vmatprep.subr.mxu0 0.0
        %1333 = vmatpush2.xpose.msra.mxu0 0.0
        %1334 = vmatprep.subr.mxu0 0.0
        %1335 = vmatpush2.xpose.msra.mxu0 0.0
        %1336 = vmatprep.mubr.f32.mxu0 0.0
        %1337 = vmatmul.mubr.f32.gmra.mxu0 %v1268
        %v1338 = vpop.f32.mrf.mxu0
        %v1339 = vadd.f32 0.0, %v1338
        %v1340 = vpop.f32.mrf.mxu0
        %1341 = vdwg.mxu0
        %v1342 = vsel %vm832, %v1339, -1e+30
        %v1343 = vsel %vm750, %v1342, -inf
        %1344 = vmax.xlane.f32.xlu0 %v1343
        %v1345 = vpop.xlane.xlu0 %1344
        %v1346 = vsub.f32 %v1342, %v1345
        %v1347 = vmul.f32 %v1346, 1.442695
        %v1348 = vpow.pop %v1347
        %v1349 = vsel %vm750, %v1348, 0.0
        %1350 = vadd.xlane.f32.xlu0 %v1349
        %v1351 = vpop.xlane.xlu0 %1350
        %v1352 = vrcp.pop %v1351
        %v1353 = vmul.f32 %v1348, %v1352
        %1354 = vrot.lane.b32.xlu0 %v747, 104
        %v1355 = vpop.permute.xlu0 %1354
        %v1358 = vsel %vm750, %v1353, 0
        %1360 = vmatprep.subr.mxu0 0.0
        %1361 = vmatpush1.msra.mxu0 0.0
        %1362 = vmatprep.subr.mxu0 0.0
        %1363 = vmatpush1.msra.mxu0 0.0
        %1364 = vmatprep.subr.mxu0 0.0
        %1365 = vmatpush1.msra.mxu0 0.0
        %1366 = vmatprep.subr.mxu0 0.0
        %1367 = vmatpush1.msra.mxu0 0.0
        %1368 = vmatprep.subr.mxu0 0.0
        %1369 = vmatpush1.msra.mxu0 0.0
        %1370 = vmatprep.subr.mxu0 0.0
        %1371 = vmatpush1.msra.mxu0 0.0
        %1372 = vmatprep.subr.mxu0 0.0
        %1373 = vmatpush1.msra.mxu0 0.0
        %1374 = vmatprep.subr.mxu0 0.0
        %1375 = vmatpush1.msra.mxu0 0.0
        %1376 = vmatprep.subr.mxu0 0.0
        %1377 = vmatpush1.msra.mxu0 0.0
        %1378 = vmatprep.subr.mxu0 0.0
        %1379 = vmatpush1.msra.mxu0 0.0
        %1380 = vmatprep.subr.mxu0 0.0
        %1381 = vmatpush1.msra.mxu0 0.0
        %1382 = vmatprep.subr.mxu0 0.0
        %1383 = vmatpush1.msra.mxu0 0.0
        %1384 = vmatprep.subr.mxu0 0.0
        %1385 = vmatpush1.msra.mxu0 0.0
        %1386 = vmatprep.subr.mxu0 0.0
        %1387 = vmatpush1.msra.mxu0 0.0
        %1388 = vmatprep.subr.mxu0 0.0
        %1389 = vmatpush1.msra.mxu0 0.0
        %1390 = vmatprep.subr.mxu0 0.0
        %1391 = vmatpush1.msra.mxu0 %v1355
        %1392 = vmatprep.subr.mxu0 0.0
        %1393 = vmatpush2.msra.mxu0 0.0
        %1394 = vmatprep.subr.mxu0 0.0
        %1395 = vmatpush2.msra.mxu0 0.0
        %1396 = vmatprep.subr.mxu0 0.0
        %1397 = vmatpush2.msra.mxu0 0.0
        %1398 = vmatprep.subr.mxu0 0.0
        %1399 = vmatpush2.msra.mxu0 0.0
        %1400 = vmatprep.subr.mxu0 0.0
        %1401 = vmatpush2.msra.mxu0 0.0
        %1402 = vmatprep.subr.mxu0 0.0
        %1403 = vmatpush2.msra.mxu0 0.0
        %1404 = vmatprep.subr.mxu0 0.0
        %1405 = vmatpush2.msra.mxu0 0.0
        %1406 = vmatprep.subr.mxu0 0.0
        %1407 = vmatpush2.msra.mxu0 0.0
        %1408 = vmatprep.subr.mxu0 0.0
        %1409 = vmatpush2.msra.mxu0 0.0
        %1410 = vmatprep.subr.mxu0 0.0
        %1411 = vmatpush2.msra.mxu0 0.0
        %1412 = vmatprep.subr.mxu0 0.0
        %1413 = vmatpush2.msra.mxu0 0.0
        %1414 = vmatprep.subr.mxu0 0.0
        %1415 = vmatpush2.msra.mxu0 0.0
        %1416 = vmatprep.subr.mxu0 0.0
        %1417 = vmatpush2.msra.mxu0 0.0
        %1418 = vmatprep.subr.mxu0 0.0
        %1419 = vmatpush2.msra.mxu0 0.0
        %1420 = vmatprep.subr.mxu0 0.0
        %1421 = vmatpush2.msra.mxu0 0.0
        %1422 = vmatprep.subr.mxu0 0.0
        %1423 = vmatpush2.msra.mxu0 0.0
        %1424 = vmatprep.mubr.f32.mxu0 0.0
        %1425 = vmatmul.mubr.f32.gmra.mxu0 %v1358
        %v1426 = vpop.f32.mrf.mxu0
        %v1427 = vadd.f32 0.0, %v1426
        %v1428 = vpop.f32.mrf.mxu0
        %1429 = vdwg.mxu0
        %1431 = vrot.lane.b32.xlu0 %v1427, 24
        %v1432 = vpop.permute.xlu0 %1431
        %vm1434 = vcmask 261312
        %1435 = vst.msk [vmem:[#allocation4] sm:$0xff] %vm1434, %v1432
        %v1436 = vld [vmem:[#allocation4] sm:$0xff]
        %v1437 = vld [vmem:[%s10] sm:$0xff]
        %v1438 = vld [vmem:[%s10 + $0x8] sm:$0xff]
        %v1439 = vld [vmem:[%s10 + $0x10] sm:$0xff]
        %v1440 = vld [vmem:[%s10 + $0x18] sm:$0xff]
        %v1441 = vld [vmem:[%s11] sm:$0x1]
        %v1443 = vlaneseq
        %v1444 = vshrl.u32 %v1443, 7
        %v1445 = vsub.s32 0, %v1444
        %v1446 = vrot.slane %v1441, %v1445
        %v1449 = vsel %vm671, %v1436, 0
        %1451 = vmatprep.subr.mxu0 0.0
        %1452 = vmatpush1.msra.mxu0 0.0
        %1453 = vmatprep.subr.mxu0 0.0
        %1454 = vmatpush1.msra.mxu0 0.0
        %1455 = vmatprep.subr.mxu0 0.0
        %1456 = vmatpush1.msra.mxu0 0.0
        %1457 = vmatprep.subr.mxu0 0.0
        %1458 = vmatpush1.msra.mxu0 0.0
        %1459 = vmatprep.subr.mxu0 0.0
        %1460 = vmatpush1.msra.mxu0 0.0
        %1461 = vmatprep.subr.mxu0 0.0
        %1462 = vmatpush1.msra.mxu0 0.0
        %1463 = vmatprep.subr.mxu0 0.0
        %1464 = vmatpush1.msra.mxu0 0.0
        %1465 = vmatprep.subr.mxu0 0.0
        %1466 = vmatpush1.msra.mxu0 0.0
        %1467 = vmatprep.subr.mxu0 0.0
        %1468 = vmatpush1.msra.mxu0 0.0
        %1469 = vmatprep.subr.mxu0 0.0
        %1470 = vmatpush1.msra.mxu0 0.0
        %1471 = vmatprep.subr.mxu0 0.0
        %1472 = vmatpush1.msra.mxu0 0.0
        %1473 = vmatprep.subr.mxu0 0.0
        %1474 = vmatpush1.msra.mxu0 0.0
        %1475 = vmatprep.subr.mxu0 0.0
        %1476 = vmatpush1.msra.mxu0 %v1440
        %1477 = vmatprep.subr.mxu0 0.0
        %1478 = vmatpush1.msra.mxu0 %v1439
        %1479 = vmatprep.subr.mxu0 0.0
        %1480 = vmatpush1.msra.mxu0 %v1438
        %1481 = vmatprep.subr.mxu0 0.0
        %1482 = vmatpush1.msra.mxu0 %v1437
        %1483 = vmatprep.subr.mxu0 0.0
        %1484 = vmatpush2.msra.mxu0 0.0
        %1485 = vmatprep.subr.mxu0 0.0
        %1486 = vmatpush2.msra.mxu0 0.0
        %1487 = vmatprep.subr.mxu0 0.0
        %1488 = vmatpush2.msra.mxu0 0.0
        %1489 = vmatprep.subr.mxu0 0.0
        %1490 = vmatpush2.msra.mxu0 0.0
        %1491 = vmatprep.subr.mxu0 0.0
        %1492 = vmatpush2.msra.mxu0 0.0
        %1493 = vmatprep.subr.mxu0 0.0
        %1494 = vmatpush2.msra.mxu0 0.0
        %1495 = vmatprep.subr.mxu0 0.0
        %1496 = vmatpush2.msra.mxu0 0.0
        %1497 = vmatprep.subr.mxu0 0.0
        %1498 = vmatpush2.msra.mxu0 0.0
        %1499 = vmatprep.subr.mxu0 0.0
        %1500 = vmatpush2.msra.mxu0 0.0
        %1501 = vmatprep.subr.mxu0 0.0
        %1502 = vmatpush2.msra.mxu0 0.0
        %1503 = vmatprep.subr.mxu0 0.0
        %1504 = vmatpush2.msra.mxu0 0.0
        %1505 = vmatprep.subr.mxu0 0.0
        %1506 = vmatpush2.msra.mxu0 0.0
        %1507 = vmatprep.subr.mxu0 0.0
        %1508 = vmatpush2.msra.mxu0 0.0
        %1509 = vmatprep.subr.mxu0 0.0
        %1510 = vmatpush2.msra.mxu0 0.0
        %1511 = vmatprep.subr.mxu0 0.0
        %1512 = vmatpush2.msra.mxu0 0.0
        %1513 = vmatprep.subr.mxu0 0.0
        %1514 = vmatpush2.msra.mxu0 0.0
        %1515 = vmatprep.mubr.f32.mxu0 0.0
        %1516 = vmatmul.mubr.f32.gmra.mxu0 %v1449
        %v1517 = vpop.f32.mrf.mxu0
        %v1518 = vadd.f32 %v1446, %v1517
        %v1519 = vpop.f32.mrf.mxu0
        %1520 = vdwg.mxu0
        %1521 = vst.msk [vmem:[%s463] sm:$0xff] %vm671, %v1518
        %s1522 = sand.u32 %s322, 1
        %s1523 = scalar_lea.sflag [#allocation6], %s1522
        %s1524 = sand.u32 %s322, 1
        %s1525 = smul.addr %s1524, 8
        %s1526 = scalar_lea.vmem [#allocation5], %s1525
        // Predicated region
        $region73: #{mha_forward.1} parent=67 // pred_check
          %p1527 = pneg %p332
        $region74: #{mha_forward.1} parent=67 // pred_check_branch
          %1529 = sbr.rel (%p1527) target = $region76
        $region75: #{mha_forward.1} parent=67 // pred_region
          %s1531 = ssub.s32 128, 128
          %1532 = vsyncadd %s1523, %s1531
          %s1533 = sadd.s32 %s31, %s30
          %s1534 = smul.addr %s1533, 128
          %s1535 = scalar_lea.hbm %s12, %s1534
          %s1537 = sshll.u32 %s1526, 4
          %s1538 = int_to_ptr.vmem [resolvable:$true] %s1537
          %1540 = dma.vmem_to_hbm [thread:$0]  %s1538, 128, %s1535, %s1523
        $region76: #{mha_forward.1} parent=67 // pred_fallthru
          _
      $region68: #{mha_forward.1} parent=5 // pred_fallthru
        _
      %p1541 = scmp.le.s32.totalorder 2, %s21
      // Predicated region
      $region77: #{mha_forward.1} parent=5 // pred_check
        %p1542 = pneg %p1541
      $region78: #{mha_forward.1} parent=5 // pred_check_branch
        %1544 = sbr.rel (%p1542) target = $region80
      $region79: #{mha_forward.1} parent=5 // pred_region
        %s1545 = ssub.s32 %s21, 2
        // Predicated region
        $region81: #{mha_forward.1} parent=79 // pred_check
          %p1546 = pneg %p338
        $region82: #{mha_forward.1} parent=79 // pred_check_branch
          %1548 = sbr.rel (%p1546) target = $region84
        $region83: #{mha_forward.1} parent=79 // pred_region
          %s1549 = sand.u32 %s323, 1
          %s1550 = scalar_lea.sflag [#allocation6], %s1549
          %s1551 = sand.u32 %s323, 1
          %s1552 = smul.addr %s1551, 8
          %s1553 = scalar_lea.vmem [#allocation5], %s1552
          %1554 = dma.done %s1550, 128
        $region84: #{mha_forward.1} parent=79 // pred_fallthru
          _
      $region80: #{mha_forward.1} parent=5 // pred_fallthru
        _
    $region6: #{mha_forward.1} parent=1 // loop_footer
      %s25 = sadd.s32 1, %s21
    $region7: #{mha_forward.1} parent=1 // loop_footer_branch
      %20 = sbr.rel target = $region3
    $region8: #{mha_forward.1} parent=1 // loop_exit
      _
    %1555 = vsyncpa [#allocation6], 1
    %s1556 = scalar_lea.sflag [#allocation6], 1
    %1557 = vsyncpa %s1556, 1

</llo_original>
